<compile_context>
chip_gen: v7x
topology: tpu7x:2x2x1
jax: 0.10.0
libtpu: 0.0.40
codegen_flags: <defaults>
</compile_context>

<pallas_src>
import jax
import jax.numpy as jnp
from jax.scipy.linalg import block_diag
from jax.experimental import pallas as pl
from jax.experimental.pallas import tpu as pltpu

LANE = 128


def _round_up(n, m):
    return ((n + m - 1) // m) * m


# ----------------------------- weight preparation ----------------------------
def _prepare_kernel_params(p, weight_dtype=jnp.float32):
    """Pack weights into lane-dense fused slabs (biases folded via a 'ones' input column)."""
    f32 = jnp.float32
    H = p["fc1_w"].shape[1]                  # hidden (128)
    L = p["mu_w"].shape[1]                   # latent
    GH = p["g1_w"].shape[1]                  # gate hidden (128)
    C = p["g1_w"].shape[0] - L               # frame_size * num_condition_frames
    fs = p["fc2_w"].shape[0] - H             # frame_size
    x_dim = p["fc1_w"].shape[0] - C          # frame_size * num_future_predictions
    E = p["d_fc4_w"].shape[0]
    O = p["d_out_w"].shape[2]
    EH, EO = E * H, E * O
    assert x_dim == fs, "module wiring requires num_future_predictions == 1"

    in_used = x_dim + C + L + 1              # x | c | eps | ones
    IN_PAD = _round_up(in_used, LANE)
    ones_row = x_dim + C + L

    def wide(w):                             # [E, K, N] -> [K, E*N]  (expert-major cols)
        return jnp.transpose(w, (1, 0, 2)).reshape(w.shape[1], -1)

    def place(width, placements):            # [IN_PAD, width] with row-placed blocks
        m = jnp.zeros((IN_PAD, width), f32)
        for r0, blk in placements:
            m = m.at[r0:r0 + blk.shape[0], :].set(blk.astype(f32))
        return m

    w4c_wide = wide(p["d_fc4_w"][:, L:, :])          # [C, E*H]
    w4z_wide = wide(p["d_fc4_w"][:, :L, :])          # [L, E*H]
    w5z_wide = wide(p["d_fc5_w"][:, :L, :])          # [L, E*H]
    woz_wide = wide(p["d_out_w"][:, :L, :])          # [L, E*O]
    b4_flat = p["d_fc4_b"].reshape(1, EH)
    b5_flat = p["d_fc5_b"].reshape(1, EH)
    bo_flat = p["d_out_b"].reshape(1, EO)

    # ---------- fused input-projection slab (LHS = [x|c|eps|1|0...]) ----------
    in_segs = [
        ("fc1", H, [(0, p["fc1_w"][:x_dim]), (x_dim, p["fc1_w"][x_dim:]),
                    (ones_row, p["fc1_b"])]),
        ("fc2x", H, [(0, p["fc2_w"][:fs]), (ones_row, p["fc2_b"])]),
        ("g1c", GH, [(x_dim, p["g1_w"][L:]), (ones_row, p["g1_b"])]),
        ("fc4c", EH, [(x_dim, w4c_wide), (ones_row, b4_flat)]),
        ("stats", 2 * L,
         [(0, jnp.concatenate([p["mu_w"][:fs], p["logvar_w"][:fs]], axis=1)),
          (ones_row, jnp.concatenate([p["mu_b"], p["logvar_b"]], axis=1))]),
    ]
    in_offs, cols, off = {}, [], 0
    for name, width, placements in in_segs:
        wpad = _round_up(width, LANE)
        cols.append(jnp.pad(place(width, placements), ((0, 0), (0, wpad - width))))
        in_offs[name] = off
        off += wpad
    w_in = jnp.concatenate(cols, axis=1)
    n_in = off

    # ---------- fused z-projection slab (LHS = z) ----------
    z_segs = [
        ("g1z", p["g1_w"][:L]), ("g2z", p["g2_w"][:L]), ("g3z", p["g3_w"][:L]),
        ("fc4z", w4z_wide), ("fc5z", w5z_wide), ("outz", woz_wide),
    ]
    z_offs, cols, off = {}, [], 0
    for name, blk in z_segs:
        width = blk.shape[1]
        wpad = _round_up(width, LANE)
        cols.append(jnp.pad(blk.astype(f32), ((0, 0), (0, wpad - width))))
        z_offs[name] = off
        off += wpad
    w_z = jnp.concatenate(cols, axis=1)
    n_z = off

    # ---------- remaining (hidden-LHS) weights ----------
    w2h = p["fc2_w"][fs:]                                                  # [H, H]
    wml = jnp.concatenate([p["mu_w"][fs:], p["logvar_w"][fs:]], axis=1)    # [H, 2L]
    wg2h = p["g2_w"][L:]                                                   # [GH, GH]
    wg3h = p["g3_w"][L:]                                                   # [GH, E]
    w5h = p["d_fc5_w"][:, L:, :].reshape(EH, H)                            # per-expert rows
    woh = block_diag(*[p["d_out_w"][e, L:, :] for e in range(E)])          # [EH, EO]

    cast = lambda w: w.astype(weight_dtype)
    weights = [
        cast(w_in), cast(w_z),
        cast(w2h), cast(wml),
        cast(wg2h), p["g2_b"].astype(f32),
        cast(wg3h), p["g3_b"].astype(f32),
        cast(w5h), b5_flat.astype(f32),
        cast(woh), bo_flat.astype(f32),
    ]
    dims = dict(L=L, H=H, GH=GH, C=C, fs=fs, x_dim=x_dim, E=E, O=O,
                IN_PAD=IN_PAD, N_IN=n_in, N_Z=n_z,
                in_offs=in_offs, z_offs=z_offs)
    return weights, dims


# ----------------------------- kernel factory --------------------------------
def _build_kernel(dims):
    L, H, GH = dims["L"], dims["H"], dims["GH"]
    E, O = dims["E"], dims["O"]
    x_dim, C = dims["x_dim"], dims["C"]
    EH, EO = E * H, E * O
    io, zo = dims["in_offs"], dims["z_offs"]
    EPS0 = x_dim + C
    OUT_W = dims["OUT_W"]
    USED = EO + 2 * L + E

    def elu(v):  # F.elu alpha=1; exp only on clamped-negative branch (no inf lanes)
        return jnp.where(v > 0, v, jnp.exp(jnp.minimum(v, 0.0)) - 1.0)

    def mm(a, w):  # MXU matmul, f32 accumulation (optional bf16 weights)
        return jnp.dot(a.astype(w.dtype), w, preferred_element_type=jnp.float32)

    def kernel(inp_ref, w_in_ref, w_z_ref, w2h_ref, wml_ref,
               wg2h_ref, bg2_ref, wg3h_ref, bg3_ref,
               w5h_ref, b5_ref, woh_ref, bo_ref, out_ref):
        inp = inp_ref[...]                                     # [tb, IN_PAD]
        eps = inp[:, EPS0:EPS0 + L]

        # ----- encoder (one wide input-projection matmul, biases folded) -----
        s_in = mm(inp, w_in_ref[...])                          # [tb, N_IN]
        h1 = elu(s_in[:, io["fc1"]:io["fc1"] + H])
        h2 = elu(s_in[:, io["fc2x"]:io["fc2x"] + H] + mm(h1, w2h_ref[...]))
        stats = s_in[:, io["stats"]:io["stats"] + 2 * L] + mm(h2, wml_ref[...])
        mu = stats[:, :L]
        logvar = stats[:, L:2 * L]
        z = mu + eps * jnp.exp(0.5 * logvar)                   # reparameterize

        # ----- one wide z-projection matmul shared by gate + all experts -----
        zs = mm(z, w_z_ref[...])                               # [tb, N_Z]

        # gate + softmax
        g1 = elu(s_in[:, io["g1c"]:io["g1c"] + GH] + zs[:, zo["g1z"]:zo["g1z"] + GH])
        g2 = elu(zs[:, zo["g2z"]:zo["g2z"] + GH] + mm(g1, wg2h_ref[...]) + bg2_ref[...])
        logits = zs[:, zo["g3z"]:zo["g3z"] + E] + mm(g2, wg3h_ref[...]) + bg3_ref[...]
        m = jnp.max(logits, axis=1, keepdims=True)
        ex = jnp.exp(logits - m)
        coef = ex / jnp.sum(ex, axis=1, keepdims=True)

        # mixture-of-experts decoder
        h4 = elu(s_in[:, io["fc4c"]:io["fc4c"] + EH] + zs[:, zo["fc4z"]:zo["fc4z"] + EH])
        h5_parts = []
        for e in range(E):                                     # unrolled; H=128 lane-aligned
            pre = (zs[:, zo["fc5z"] + e * H: zo["fc5z"] + (e + 1) * H]
                   + mm(h4[:, e * H:(e + 1) * H], w5h_ref[e * H:(e + 1) * H, :])
                   + b5_ref[:, e * H:(e + 1) * H])
            h5_parts.append(elu(pre))
        h5 = jnp.concatenate(h5_parts, axis=1)                 # [tb, E*H]
        pred = zs[:, zo["outz"]:zo["outz"] + EO] + mm(h5, woh_ref[...]) + bo_ref[...]

        # ----- single fused, lane-dense output slab -----
        out_ref[:, 0:EO] = pred
        out_ref[:, EO:EO + L] = mu
        out_ref[:, EO + L:EO + 2 * L] = logvar
        out_ref[:, EO + 2 * L:USED] = coef
        if OUT_W > USED:
            out_ref[:, USED:] = jnp.zeros((inp.shape[0], OUT_W - USED), jnp.float32)

    return kernel


# ----------------------------- wrapper ---------------------------------------
def _pick_tile(B, tile_b):
    """Batch tile: big enough to amortize per-step overhead, >=2 steps when possible (v7x)."""
    B8 = _round_up(max(B, 1), 8)
    if B8 >= 2 * tile_b:
        tile = tile_b
    elif B8 >= 16:
        tile = _round_up((B8 + 1) // 2, 8)
    else:
        tile = B8
    return tile, _round_up(B8, tile)


def pose_mixture_specialist_vae_forward(x, c, eps, params, num_experts, *,
                                        tile_b=256, weight_dtype=jnp.float32):
    B = x.shape[0]
    weights, dims = _prepare_kernel_params(params, weight_dtype)
    L, E, O = dims["L"], dims["E"], dims["O"]
    assert E == num_experts
    EO = E * O
    USED = EO + 2 * L + E
    OUT_W = _round_up(USED, LANE)
    dims["OUT_W"] = OUT_W
    IN_PAD = dims["IN_PAD"]

    tile, padded_B = _pick_tile(B, tile_b)

    # Fused, lane-dense input slab: [x | c | eps | ones | 0-pad]; one DMA per step.
    fused = jnp.concatenate(
        [x.astype(jnp.float32), c.astype(jnp.float32), eps.astype(jnp.float32),
         jnp.ones((B, 1), jnp.float32)], axis=1)
    fused = jnp.pad(fused, ((0, padded_B - B), (0, IN_PAD - fused.shape[1])))

    kernel = _build_kernel(dims)

    def resident_spec(w):  # full array, constant index -> stays VMEM-resident across steps
        return pl.BlockSpec(w.shape, lambda i, _n=w.ndim: (0,) * _n)

    in_specs = ([pl.BlockSpec((tile, IN_PAD), lambda i: (i, 0))]
                + [resident_spec(w) for w in weights])
    out_specs = pl.BlockSpec((tile, OUT_W), lambda i: (i, 0))

    out = pl.pallas_call(
        kernel,
        out_shape=jax.ShapeDtypeStruct((padded_B, OUT_W), jnp.float32),
        grid=(padded_B // tile,),
        in_specs=in_specs,
        out_specs=out_specs,
        compiler_params=pltpu.CompilerParams(
            dimension_semantics=("parallel",)),
    )(fused, *weights)

    preds = out[:B, :EO].reshape(B, E, O)
    mu = out[:B, EO:EO + L]
    logvar = out[:B, EO + L:EO + 2 * L]
    coef = out[:B, EO + 2 * L:EO + 2 * L + E]
    return preds, mu, logvar, coef


# ----------------------------- parameter init --------------------------------
def _linear(key, fan_in, fan_out):
    """PyTorch-style uniform(-1/sqrt(in), 1/sqrt(in)); weight stored as [in, out]."""
    kw, kb = jax.random.split(key)
    bound = 1.0 / jnp.sqrt(jnp.float32(fan_in))
    w = jax.random.uniform(kw, (fan_in, fan_out), jnp.float32, -bound, bound)
    b = jax.random.uniform(kb, (1, fan_out), jnp.float32, -bound, bound)
    return w, b


def init_params(key, frame_size, latent_size, hidden_size,
                num_condition_frames, num_future_predictions, num_experts):
    enc_in = frame_size * (num_future_predictions + num_condition_frames)
    dec_in = latent_size + frame_size * num_condition_frames
    dec_out = num_future_predictions * frame_size
    gate_h = 128

    keys = jax.random.split(key, 8 + 3 * num_experts)
    p = {}
    p["fc1_w"], p["fc1_b"] = _linear(keys[0], enc_in, hidden_size)
    p["fc2_w"], p["fc2_b"] = _linear(keys[1], frame_size + hidden_size, hidden_size)
    p["mu_w"], p["mu_b"] = _linear(keys[2], frame_size + hidden_size, latent_size)
    p["logvar_w"], p["logvar_b"] = _linear(keys[3], frame_size + hidden_size, latent_size)
    p["g1_w"], p["g1_b"] = _linear(keys[4], dec_in, gate_h)
    p["g2_w"], p["g2_b"] = _linear(keys[5], latent_size + gate_h, gate_h)
    p["g3_w"], p["g3_b"] = _linear(keys[6], latent_size + gate_h, num_experts)
    d4w, d4b, d5w, d5b, dow, dob = [], [], [], [], [], []
    for e in range(num_experts):
        w, b = _linear(keys[8 + 3 * e + 0], dec_in, hidden_size)
        d4w.append(w); d4b.append(b)
        w, b = _linear(keys[8 + 3 * e + 1], latent_size + hidden_size, hidden_size)
        d5w.append(w); d5b.append(b)
        w, b = _linear(keys[8 + 3 * e + 2], latent_size + hidden_size, dec_out)
        dow.append(w); dob.append(b)
    p["d_fc4_w"] = jnp.stack(d4w); p["d_fc4_b"] = jnp.stack(d4b)
    p["d_fc5_w"] = jnp.stack(d5w); p["d_fc5_b"] = jnp.stack(d5b)
    p["d_out_w"] = jnp.stack(dow); p["d_out_b"] = jnp.stack(dob)
    return p


# ----------------------------- pure-JAX reference -----------------------------
def _reference(x, c, eps, p, num_experts):
    elu = lambda v: jnp.where(v > 0, v, jnp.exp(jnp.minimum(v, 0.0)) - 1.0)
    h1 = elu(jnp.concatenate([x, c], 1) @ p["fc1_w"] + p["fc1_b"])
    h2 = elu(jnp.concatenate([x, h1], 1) @ p["fc2_w"] + p["fc2_b"])
    s = jnp.concatenate([x, h2], 1)
    mu = s @ p["mu_w"] + p["mu_b"]
    logvar = s @ p["logvar_w"] + p["logvar_b"]
    z = mu + eps * jnp.exp(0.5 * logvar)
    g1 = elu(jnp.concatenate([z, c], 1) @ p["g1_w"] + p["g1_b"])
    g2 = elu(jnp.concatenate([z, g1], 1) @ p["g2_w"] + p["g2_b"])
    logits = jnp.concatenate([z, g2], 1) @ p["g3_w"] + p["g3_b"]
    coef = jax.nn.softmax(logits, axis=1)
    zc = jnp.concatenate([z, c], 1)
    preds = []
    for i in range(num_experts):
        h4 = elu(zc @ p["d_fc4_w"][i] + p["d_fc4_b"][i])
        h5 = elu(jnp.concatenate([z, h4], 1) @ p["d_fc5_w"][i] + p["d_fc5_b"][i])
        preds.append(jnp.concatenate([z, h5], 1) @ p["d_out_w"][i] + p["d_out_b"][i])
    return jnp.stack(preds, axis=1), mu, logvar, coef


# ----------------------------- main ------------------------------------------
if __name__ == "__main__":
    # Small config consistent with the module (num_future_predictions must be 1
    # for Encoder.fc2 / Decoder wiring to match, as in the original code).
    frame_size = 16
    latent_size = 8
    hidden_size = 128
    num_condition_frames = 2
    num_future_predictions = 1
    num_experts = 4
    batch = 2

    key = jax.random.PRNGKey(0)
    kx, kc, keps, kp = jax.random.split(key, 4)

    x = jax.random.normal(kx, (batch, frame_size * num_future_predictions), jnp.float32)
    c = jax.random.normal(kc, (batch, frame_size * num_condition_frames), jnp.float32)
    # TODO(synk): eps could be generated in-kernel via pltpu.prng_* once the reference
    # check is relaxed; for now the reparameterization noise is supplied as an input.
    eps = jax.random.normal(keps, (batch, latent_size), jnp.float32)

    params = init_params(kp, frame_size, latent_size, hidden_size,
                         num_condition_frames, num_future_predictions, num_experts)

    preds, mu, logvar, coef = pose_mixture_specialist_vae_forward(
        x, c, eps, params, num_experts
    )
    jax.block_until_ready((preds, mu, logvar, coef))

    # correctness check against pure-JAX reference
    r_preds, r_mu, r_logvar, r_coef = _reference(x, c, eps, params, num_experts)
    assert preds.shape == (batch, num_experts, num_future_predictions * frame_size)
    assert mu.shape == (batch, latent_size) and logvar.shape == (batch, latent_size)
    assert coef.shape == (batch, num_experts)
    for a, b in ((preds, r_preds), (mu, r_mu), (logvar, r_logvar), (coef, r_coef)):
        assert jnp.allclose(a, b, atol=1e-4, rtol=1e-4)

    print("KERNEL_OK")
</pallas_src>

<mosaic_0001>
module attributes {stable_mosaic.version = 11 : i64} {
  func.func @kernel(%arg0: i32, %arg1: memref<8x128xf32, #tpu.memory_space<vmem>>, %arg2: memref<128x1024xf32, #tpu.memory_space<vmem>>, %arg3: memref<8x1536xf32, #tpu.memory_space<vmem>>, %arg4: memref<128x128xf32, #tpu.memory_space<vmem>>, %arg5: memref<128x16xf32, #tpu.memory_space<vmem>>, %arg6: memref<128x128xf32, #tpu.memory_space<vmem>>, %arg7: memref<1x128xf32, #tpu.memory_space<vmem>>, %arg8: memref<128x4xf32, #tpu.memory_space<vmem>>, %arg9: memref<1x4xf32, #tpu.memory_space<vmem>>, %arg10: memref<512x128xf32, #tpu.memory_space<vmem>>, %arg11: memref<1x512xf32, #tpu.memory_space<vmem>>, %arg12: memref<512x64xf32, #tpu.memory_space<vmem>>, %arg13: memref<1x64xf32, #tpu.memory_space<vmem>>, %arg14: memref<8x128xf32, #tpu.memory_space<vmem>>) attributes {dimension_semantics = [#tpu.dimension_semantics<parallel>], iteration_bounds = array<i64: 1>, scalar_prefetch = 0 : i64, scratch_operands = 0 : i64, tpu.core_type = #tpu.core_type<tc>, window_params = [{transform_indices = @transform_0, window_bounds = array<i64: 8, 128>}, {pipeline_mode = #tpu.pipeline_mode<synchronous>, transform_indices = @transform_1, window_bounds = array<i64: 128, 1024>}, {pipeline_mode = #tpu.pipeline_mode<synchronous>, transform_indices = @transform_2, window_bounds = array<i64: 8, 1536>}, {pipeline_mode = #tpu.pipeline_mode<synchronous>, transform_indices = @transform_3, window_bounds = array<i64: 128, 128>}, {pipeline_mode = #tpu.pipeline_mode<synchronous>, transform_indices = @transform_4, window_bounds = array<i64: 128, 16>}, {pipeline_mode = #tpu.pipeline_mode<synchronous>, transform_indices = @transform_5, window_bounds = array<i64: 128, 128>}, {pipeline_mode = #tpu.pipeline_mode<synchronous>, transform_indices = @transform_6, window_bounds = array<i64: 1, 128>}, {pipeline_mode = #tpu.pipeline_mode<synchronous>, transform_indices = @transform_7, window_bounds = array<i64: 128, 4>}, {pipeline_mode = #tpu.pipeline_mode<synchronous>, transform_indices = @transform_8, window_bounds = array<i64: 1, 4>}, {pipeline_mode = #tpu.pipeline_mode<synchronous>, transform_indices = @transform_9, window_bounds = array<i64: 512, 128>}, {pipeline_mode = #tpu.pipeline_mode<synchronous>, transform_indices = @transform_10, window_bounds = array<i64: 1, 512>}, {pipeline_mode = #tpu.pipeline_mode<synchronous>, transform_indices = @transform_11, window_bounds = array<i64: 512, 64>}, {pipeline_mode = #tpu.pipeline_mode<synchronous>, transform_indices = @transform_12, window_bounds = array<i64: 1, 64>}, {transform_indices = @transform_13, window_bounds = array<i64: 8, 128>}]} {
    %c0 = arith.constant 0 : index
    %c0_0 = arith.constant 0 : index
    %0 = vector.load %arg1[%c0, %c0_0] : memref<8x128xf32, #tpu.memory_space<vmem>>, vector<8x128xf32>
    %1 = vector.extract_strided_slice %0 {offsets = [0, 48], sizes = [8, 8], strides = [1, 1]} : vector<8x128xf32> to vector<8x8xf32>
    %c0_1 = arith.constant 0 : index
    %c0_2 = arith.constant 0 : index
    %2 = vector.load %arg2[%c0_1, %c0_2] : memref<128x1024xf32, #tpu.memory_space<vmem>>, vector<128x1024xf32>
    %cst = arith.constant dense<0.000000e+00> : vector<8x1024xf32>
    %3 = tpu.matmul %0, %2, %cst {dimension_numbers = #tpu.dot_dimension_numbers<[1], [0], [0], [1], [0, 0, 1, 1], [], []>} : vector<8x128xf32>, vector<128x1024xf32>, vector<8x1024xf32> -> vector<8x1024xf32>
    %4 = vector.extract_strided_slice %3 {offsets = [0, 0], sizes = [8, 128], strides = [1, 1]} : vector<8x1024xf32> to vector<8x128xf32>
    %cst_3 = arith.constant 0.000000e+00 : f32
    %5 = vector.broadcast %cst_3 : f32 to vector<8x128xf32>
    %6 = arith.cmpf ogt, %4, %5 : vector<8x128xf32>
    %cst_4 = arith.constant 0.000000e+00 : f32
    %7 = vector.broadcast %cst_4 : f32 to vector<8x128xf32>
    %8 = arith.minimumf %4, %7 : vector<8x128xf32>
    %9 = math.exp %8 : vector<8x128xf32>
    %cst_5 = arith.constant 1.000000e+00 : f32
    %10 = vector.broadcast %cst_5 : f32 to vector<8x128xf32>
    %11 = arith.subf %9, %10 : vector<8x128xf32>
    %12 = arith.select %6, %4, %11 : vector<8x128xi1>, vector<8x128xf32>
    %13 = vector.extract_strided_slice %3 {offsets = [0, 128], sizes = [8, 128], strides = [1, 1]} : vector<8x1024xf32> to vector<8x128xf32>
    %c0_6 = arith.constant 0 : index
    %c0_7 = arith.constant 0 : index
    %14 = vector.load %arg4[%c0_6, %c0_7] : memref<128x128xf32, #tpu.memory_space<vmem>>, vector<128x128xf32>
    %cst_8 = arith.constant dense<0.000000e+00> : vector<8x128xf32>
    %15 = tpu.matmul %12, %14, %cst_8 {dimension_numbers = #tpu.dot_dimension_numbers<[1], [0], [0], [1], [0, 0, 1, 1], [], []>} : vector<8x128xf32>, vector<128x128xf32>, vector<8x128xf32> -> vector<8x128xf32>
    %16 = arith.addf %13, %15 : vector<8x128xf32>
    %cst_9 = arith.constant 0.000000e+00 : f32
    %17 = vector.broadcast %cst_9 : f32 to vector<8x128xf32>
    %18 = arith.cmpf ogt, %16, %17 : vector<8x128xf32>
    %cst_10 = arith.constant 0.000000e+00 : f32
    %19 = vector.broadcast %cst_10 : f32 to vector<8x128xf32>
    %20 = arith.minimumf %16, %19 : vector<8x128xf32>
    %21 = math.exp %20 : vector<8x128xf32>
    %cst_11 = arith.constant 1.000000e+00 : f32
    %22 = vector.broadcast %cst_11 : f32 to vector<8x128xf32>
    %23 = arith.subf %21, %22 : vector<8x128xf32>
    %24 = arith.select %18, %16, %23 : vector<8x128xi1>, vector<8x128xf32>
    %25 = vector.extract_strided_slice %3 {offsets = [0, 896], sizes = [8, 16], strides = [1, 1]} : vector<8x1024xf32> to vector<8x16xf32>
    %c0_12 = arith.constant 0 : index
    %c0_13 = arith.constant 0 : index
    %26 = vector.load %arg5[%c0_12, %c0_13] : memref<128x16xf32, #tpu.memory_space<vmem>>, vector<128x16xf32>
    %cst_14 = arith.constant dense<0.000000e+00> : vector<8x16xf32>
    %27 = tpu.matmul %24, %26, %cst_14 {dimension_numbers = #tpu.dot_dimension_numbers<[1], [0], [0], [1], [0, 0, 1, 1], [], []>} : vector<8x128xf32>, vector<128x16xf32>, vector<8x16xf32> -> vector<8x16xf32>
    %28 = arith.addf %25, %27 : vector<8x16xf32>
    %29 = vector.extract_strided_slice %28 {offsets = [0, 0], sizes = [8, 8], strides = [1, 1]} : vector<8x16xf32> to vector<8x8xf32>
    %30 = vector.extract_strided_slice %28 {offsets = [0, 8], sizes = [8, 8], strides = [1, 1]} : vector<8x16xf32> to vector<8x8xf32>
    %cst_15 = arith.constant 5.000000e-01 : f32
    %31 = vector.broadcast %cst_15 : f32 to vector<8x8xf32>
    %32 = arith.mulf %31, %30 : vector<8x8xf32>
    %33 = math.exp %32 : vector<8x8xf32>
    %34 = arith.mulf %1, %33 : vector<8x8xf32>
    %35 = arith.addf %29, %34 : vector<8x8xf32>
    %c0_16 = arith.constant 0 : index
    %c0_17 = arith.constant 0 : index
    %36 = vector.load %arg3[%c0_16, %c0_17] : memref<8x1536xf32, #tpu.memory_space<vmem>>, vector<8x1536xf32>
    %cst_18 = arith.constant dense<0.000000e+00> : vector<8x1536xf32>
    %37 = tpu.matmul %35, %36, %cst_18 {dimension_numbers = #tpu.dot_dimension_numbers<[1], [0], [0], [1], [0, 0, 1, 1], [], []>} : vector<8x8xf32>, vector<8x1536xf32>, vector<8x1536xf32> -> vector<8x1536xf32>
    %38 = vector.extract_strided_slice %3 {offsets = [0, 256], sizes = [8, 128], strides = [1, 1]} : vector<8x1024xf32> to vector<8x128xf32>
    %39 = vector.extract_strided_slice %37 {offsets = [0, 0], sizes = [8, 128], strides = [1, 1]} : vector<8x1536xf32> to vector<8x128xf32>
    %40 = arith.addf %38, %39 : vector<8x128xf32>
    %cst_19 = arith.constant 0.000000e+00 : f32
    %41 = vector.broadcast %cst_19 : f32 to vector<8x128xf32>
    %42 = arith.cmpf ogt, %40, %41 : vector<8x128xf32>
    %cst_20 = arith.constant 0.000000e+00 : f32
    %43 = vector.broadcast %cst_20 : f32 to vector<8x128xf32>
    %44 = arith.minimumf %40, %43 : vector<8x128xf32>
    %45 = math.exp %44 : vector<8x128xf32>
    %cst_21 = arith.constant 1.000000e+00 : f32
    %46 = vector.broadcast %cst_21 : f32 to vector<8x128xf32>
    %47 = arith.subf %45, %46 : vector<8x128xf32>
    %48 = arith.select %42, %40, %47 : vector<8x128xi1>, vector<8x128xf32>
    %49 = vector.extract_strided_slice %37 {offsets = [0, 128], sizes = [8, 128], strides = [1, 1]} : vector<8x1536xf32> to vector<8x128xf32>
    %c0_22 = arith.constant 0 : index
    %c0_23 = arith.constant 0 : index
    %50 = vector.load %arg6[%c0_22, %c0_23] : memref<128x128xf32, #tpu.memory_space<vmem>>, vector<128x128xf32>
    %cst_24 = arith.constant dense<0.000000e+00> : vector<8x128xf32>
    %51 = tpu.matmul %48, %50, %cst_24 {dimension_numbers = #tpu.dot_dimension_numbers<[1], [0], [0], [1], [0, 0, 1, 1], [], []>} : vector<8x128xf32>, vector<128x128xf32>, vector<8x128xf32> -> vector<8x128xf32>
    %52 = arith.addf %49, %51 : vector<8x128xf32>
    %c0_25 = arith.constant 0 : index
    %c0_26 = arith.constant 0 : index
    %53 = vector.load %arg7[%c0_25, %c0_26] : memref<1x128xf32, #tpu.memory_space<vmem>>, vector<1x128xf32>
    %54 = vector.broadcast %53 : vector<1x128xf32> to vector<8x128xf32>
    %55 = arith.addf %52, %54 : vector<8x128xf32>
    %cst_27 = arith.constant 0.000000e+00 : f32
    %56 = vector.broadcast %cst_27 : f32 to vector<8x128xf32>
    %57 = arith.cmpf ogt, %55, %56 : vector<8x128xf32>
    %cst_28 = arith.constant 0.000000e+00 : f32
    %58 = vector.broadcast %cst_28 : f32 to vector<8x128xf32>
    %59 = arith.minimumf %55, %58 : vector<8x128xf32>
    %60 = math.exp %59 : vector<8x128xf32>
    %cst_29 = arith.constant 1.000000e+00 : f32
    %61 = vector.broadcast %cst_29 : f32 to vector<8x128xf32>
    %62 = arith.subf %60, %61 : vector<8x128xf32>
    %63 = arith.select %57, %55, %62 : vector<8x128xi1>, vector<8x128xf32>
    %64 = vector.extract_strided_slice %37 {offsets = [0, 256], sizes = [8, 4], strides = [1, 1]} : vector<8x1536xf32> to vector<8x4xf32>
    %c0_30 = arith.constant 0 : index
    %c0_31 = arith.constant 0 : index
    %65 = vector.load %arg8[%c0_30, %c0_31] : memref<128x4xf32, #tpu.memory_space<vmem>>, vector<128x4xf32>
    %cst_32 = arith.constant dense<0.000000e+00> : vector<8x4xf32>
    %66 = tpu.matmul %63, %65, %cst_32 {dimension_numbers = #tpu.dot_dimension_numbers<[1], [0], [0], [1], [0, 0, 1, 1], [], []>} : vector<8x128xf32>, vector<128x4xf32>, vector<8x4xf32> -> vector<8x4xf32>
    %67 = arith.addf %64, %66 : vector<8x4xf32>
    %c0_33 = arith.constant 0 : index
    %c0_34 = arith.constant 0 : index
    %68 = vector.load %arg9[%c0_33, %c0_34] : memref<1x4xf32, #tpu.memory_space<vmem>>, vector<1x4xf32>
    %69 = vector.broadcast %68 : vector<1x4xf32> to vector<8x4xf32>
    %70 = arith.addf %67, %69 : vector<8x4xf32>
    %cst_35 = arith.constant dense<0xFF800000> : vector<8xf32>
    %71 = vector.multi_reduction <maximumf>, %70, %cst_35 [1] : vector<8x4xf32> to vector<8xf32>
    %72 = vector.shape_cast %71 : vector<8xf32> to vector<8x1xf32>
    %73 = vector.broadcast %72 : vector<8x1xf32> to vector<8x4xf32>
    %74 = arith.subf %70, %73 : vector<8x4xf32>
    %75 = math.exp %74 : vector<8x4xf32>
    %cst_36 = arith.constant dense<0.000000e+00> : vector<8xf32>
    %76 = vector.multi_reduction <add>, %75, %cst_36 [1] : vector<8x4xf32> to vector<8xf32>
    %77 = vector.shape_cast %76 : vector<8xf32> to vector<8x1xf32>
    %78 = vector.broadcast %77 : vector<8x1xf32> to vector<8x4xf32>
    %79 = arith.divf %75, %78 : vector<8x4xf32>
    %80 = vector.extract_strided_slice %3 {offsets = [0, 384], sizes = [8, 512], strides = [1, 1]} : vector<8x1024xf32> to vector<8x512xf32>
    %81 = vector.extract_strided_slice %37 {offsets = [0, 384], sizes = [8, 512], strides = [1, 1]} : vector<8x1536xf32> to vector<8x512xf32>
    %82 = arith.addf %80, %81 : vector<8x512xf32>
    %cst_37 = arith.constant 0.000000e+00 : f32
    %83 = vector.broadcast %cst_37 : f32 to vector<8x512xf32>
    %84 = arith.cmpf ogt, %82, %83 : vector<8x512xf32>
    %cst_38 = arith.constant 0.000000e+00 : f32
    %85 = vector.broadcast %cst_38 : f32 to vector<8x512xf32>
    %86 = arith.minimumf %82, %85 : vector<8x512xf32>
    %87 = math.exp %86 : vector<8x512xf32>
    %cst_39 = arith.constant 1.000000e+00 : f32
    %88 = vector.broadcast %cst_39 : f32 to vector<8x512xf32>
    %89 = arith.subf %87, %88 : vector<8x512xf32>
    %90 = arith.select %84, %82, %89 : vector<8x512xi1>, vector<8x512xf32>
    %91 = vector.extract_strided_slice %37 {offsets = [0, 896], sizes = [8, 128], strides = [1, 1]} : vector<8x1536xf32> to vector<8x128xf32>
    %92 = vector.extract_strided_slice %90 {offsets = [0, 0], sizes = [8, 128], strides = [1, 1]} : vector<8x512xf32> to vector<8x128xf32>
    %c0_40 = arith.constant 0 : index
    %c0_41 = arith.constant 0 : index
    %93 = vector.load %arg10[%c0_40, %c0_41] : memref<512x128xf32, #tpu.memory_space<vmem>>, vector<128x128xf32>
    %cst_42 = arith.constant dense<0.000000e+00> : vector<8x128xf32>
    %94 = tpu.matmul %92, %93, %cst_42 {dimension_numbers = #tpu.dot_dimension_numbers<[1], [0], [0], [1], [0, 0, 1, 1], [], []>} : vector<8x128xf32>, vector<128x128xf32>, vector<8x128xf32> -> vector<8x128xf32>
    %95 = arith.addf %91, %94 : vector<8x128xf32>
    %c0_43 = arith.constant 0 : index
    %c0_44 = arith.constant 0 : index
    %96 = vector.load %arg11[%c0_43, %c0_44] : memref<1x512xf32, #tpu.memory_space<vmem>>, vector<1x128xf32>
    %97 = vector.broadcast %96 : vector<1x128xf32> to vector<8x128xf32>
    %98 = arith.addf %95, %97 : vector<8x128xf32>
    %cst_45 = arith.constant 0.000000e+00 : f32
    %99 = vector.broadcast %cst_45 : f32 to vector<8x128xf32>
    %100 = arith.cmpf ogt, %98, %99 : vector<8x128xf32>
    %cst_46 = arith.constant 0.000000e+00 : f32
    %101 = vector.broadcast %cst_46 : f32 to vector<8x128xf32>
    %102 = arith.minimumf %98, %101 : vector<8x128xf32>
    %103 = math.exp %102 : vector<8x128xf32>
    %cst_47 = arith.constant 1.000000e+00 : f32
    %104 = vector.broadcast %cst_47 : f32 to vector<8x128xf32>
    %105 = arith.subf %103, %104 : vector<8x128xf32>
    %106 = arith.select %100, %98, %105 : vector<8x128xi1>, vector<8x128xf32>
    %107 = vector.extract_strided_slice %37 {offsets = [0, 1024], sizes = [8, 128], strides = [1, 1]} : vector<8x1536xf32> to vector<8x128xf32>
    %108 = vector.extract_strided_slice %90 {offsets = [0, 128], sizes = [8, 128], strides = [1, 1]} : vector<8x512xf32> to vector<8x128xf32>
    %c128 = arith.constant 128 : index
    %c0_48 = arith.constant 0 : index
    %109 = vector.load %arg10[%c128, %c0_48] : memref<512x128xf32, #tpu.memory_space<vmem>>, vector<128x128xf32>
    %cst_49 = arith.constant dense<0.000000e+00> : vector<8x128xf32>
    %110 = tpu.matmul %108, %109, %cst_49 {dimension_numbers = #tpu.dot_dimension_numbers<[1], [0], [0], [1], [0, 0, 1, 1], [], []>} : vector<8x128xf32>, vector<128x128xf32>, vector<8x128xf32> -> vector<8x128xf32>
    %111 = arith.addf %107, %110 : vector<8x128xf32>
    %c0_50 = arith.constant 0 : index
    %c128_51 = arith.constant 128 : index
    %112 = vector.load %arg11[%c0_50, %c128_51] : memref<1x512xf32, #tpu.memory_space<vmem>>, vector<1x128xf32>
    %113 = vector.broadcast %112 : vector<1x128xf32> to vector<8x128xf32>
    %114 = arith.addf %111, %113 : vector<8x128xf32>
    %cst_52 = arith.constant 0.000000e+00 : f32
    %115 = vector.broadcast %cst_52 : f32 to vector<8x128xf32>
    %116 = arith.cmpf ogt, %114, %115 : vector<8x128xf32>
    %cst_53 = arith.constant 0.000000e+00 : f32
    %117 = vector.broadcast %cst_53 : f32 to vector<8x128xf32>
    %118 = arith.minimumf %114, %117 : vector<8x128xf32>
    %119 = math.exp %118 : vector<8x128xf32>
    %cst_54 = arith.constant 1.000000e+00 : f32
    %120 = vector.broadcast %cst_54 : f32 to vector<8x128xf32>
    %121 = arith.subf %119, %120 : vector<8x128xf32>
    %122 = arith.select %116, %114, %121 : vector<8x128xi1>, vector<8x128xf32>
    %123 = vector.extract_strided_slice %37 {offsets = [0, 1152], sizes = [8, 128], strides = [1, 1]} : vector<8x1536xf32> to vector<8x128xf32>
    %124 = vector.extract_strided_slice %90 {offsets = [0, 256], sizes = [8, 128], strides = [1, 1]} : vector<8x512xf32> to vector<8x128xf32>
    %c256 = arith.constant 256 : index
    %c0_55 = arith.constant 0 : index
    %125 = vector.load %arg10[%c256, %c0_55] : memref<512x128xf32, #tpu.memory_space<vmem>>, vector<128x128xf32>
    %cst_56 = arith.constant dense<0.000000e+00> : vector<8x128xf32>
    %126 = tpu.matmul %124, %125, %cst_56 {dimension_numbers = #tpu.dot_dimension_numbers<[1], [0], [0], [1], [0, 0, 1, 1], [], []>} : vector<8x128xf32>, vector<128x128xf32>, vector<8x128xf32> -> vector<8x128xf32>
    %127 = arith.addf %123, %126 : vector<8x128xf32>
    %c0_57 = arith.constant 0 : index
    %c256_58 = arith.constant 256 : index
    %128 = vector.load %arg11[%c0_57, %c256_58] : memref<1x512xf32, #tpu.memory_space<vmem>>, vector<1x128xf32>
    %129 = vector.broadcast %128 : vector<1x128xf32> to vector<8x128xf32>
    %130 = arith.addf %127, %129 : vector<8x128xf32>
    %cst_59 = arith.constant 0.000000e+00 : f32
    %131 = vector.broadcast %cst_59 : f32 to vector<8x128xf32>
    %132 = arith.cmpf ogt, %130, %131 : vector<8x128xf32>
    %cst_60 = arith.constant 0.000000e+00 : f32
    %133 = vector.broadcast %cst_60 : f32 to vector<8x128xf32>
    %134 = arith.minimumf %130, %133 : vector<8x128xf32>
    %135 = math.exp %134 : vector<8x128xf32>
    %cst_61 = arith.constant 1.000000e+00 : f32
    %136 = vector.broadcast %cst_61 : f32 to vector<8x128xf32>
    %137 = arith.subf %135, %136 : vector<8x128xf32>
    %138 = arith.select %132, %130, %137 : vector<8x128xi1>, vector<8x128xf32>
    %139 = vector.extract_strided_slice %37 {offsets = [0, 1280], sizes = [8, 128], strides = [1, 1]} : vector<8x1536xf32> to vector<8x128xf32>
    %140 = vector.extract_strided_slice %90 {offsets = [0, 384], sizes = [8, 128], strides = [1, 1]} : vector<8x512xf32> to vector<8x128xf32>
    %c384 = arith.constant 384 : index
    %c0_62 = arith.constant 0 : index
    %141 = vector.load %arg10[%c384, %c0_62] : memref<512x128xf32, #tpu.memory_space<vmem>>, vector<128x128xf32>
    %cst_63 = arith.constant dense<0.000000e+00> : vector<8x128xf32>
    %142 = tpu.matmul %140, %141, %cst_63 {dimension_numbers = #tpu.dot_dimension_numbers<[1], [0], [0], [1], [0, 0, 1, 1], [], []>} : vector<8x128xf32>, vector<128x128xf32>, vector<8x128xf32> -> vector<8x128xf32>
    %143 = arith.addf %139, %142 : vector<8x128xf32>
    %c0_64 = arith.constant 0 : index
    %c384_65 = arith.constant 384 : index
    %144 = vector.load %arg11[%c0_64, %c384_65] : memref<1x512xf32, #tpu.memory_space<vmem>>, vector<1x128xf32>
    %145 = vector.broadcast %144 : vector<1x128xf32> to vector<8x128xf32>
    %146 = arith.addf %143, %145 : vector<8x128xf32>
    %cst_66 = arith.constant 0.000000e+00 : f32
    %147 = vector.broadcast %cst_66 : f32 to vector<8x128xf32>
    %148 = arith.cmpf ogt, %146, %147 : vector<8x128xf32>
    %cst_67 = arith.constant 0.000000e+00 : f32
    %149 = vector.broadcast %cst_67 : f32 to vector<8x128xf32>
    %150 = arith.minimumf %146, %149 : vector<8x128xf32>
    %151 = math.exp %150 : vector<8x128xf32>
    %cst_68 = arith.constant 1.000000e+00 : f32
    %152 = vector.broadcast %cst_68 : f32 to vector<8x128xf32>
    %153 = arith.subf %151, %152 : vector<8x128xf32>
    %154 = arith.select %148, %146, %153 : vector<8x128xi1>, vector<8x128xf32>
    %155 = tpu.concatenate %106, %122, %138, %154 in 1 : vector<8x128xf32>, vector<8x128xf32>, vector<8x128xf32>, vector<8x128xf32> -> vector<8x512xf32>
    %156 = vector.extract_strided_slice %37 {offsets = [0, 1408], sizes = [8, 64], strides = [1, 1]} : vector<8x1536xf32> to vector<8x64xf32>
    %c0_69 = arith.constant 0 : index
    %c0_70 = arith.constant 0 : index
    %157 = vector.load %arg12[%c0_69, %c0_70] : memref<512x64xf32, #tpu.memory_space<vmem>>, vector<512x64xf32>
    %cst_71 = arith.constant dense<0.000000e+00> : vector<8x64xf32>
    %158 = tpu.matmul %155, %157, %cst_71 {dimension_numbers = #tpu.dot_dimension_numbers<[1], [0], [0], [1], [0, 0, 1, 1], [], []>} : vector<8x512xf32>, vector<512x64xf32>, vector<8x64xf32> -> vector<8x64xf32>
    %159 = arith.addf %156, %158 : vector<8x64xf32>
    %c0_72 = arith.constant 0 : index
    %c0_73 = arith.constant 0 : index
    %160 = vector.load %arg13[%c0_72, %c0_73] : memref<1x64xf32, #tpu.memory_space<vmem>>, vector<1x64xf32>
    %161 = vector.broadcast %160 : vector<1x64xf32> to vector<8x64xf32>
    %162 = arith.addf %159, %161 : vector<8x64xf32>
    %c0_74 = arith.constant 0 : index
    %c0_75 = arith.constant 0 : index
    %163 = vector.load %arg14[%c0_74, %c0_75] : memref<8x128xf32, #tpu.memory_space<vmem>>, vector<8x64xf32>
    tpu.vector_store %arg14[%c0_74, %c0_75], %162 {strides = array<i32>} : memref<8x128xf32, #tpu.memory_space<vmem>>, vector<8x64xf32>,
    %c0_76 = arith.constant 0 : index
    %c64 = arith.constant 64 : index
    %164 = vector.load %arg14[%c0_76, %c64] : memref<8x128xf32, #tpu.memory_space<vmem>>, vector<8x8xf32>
    tpu.vector_store %arg14[%c0_76, %c64], %29 {strides = array<i32>} : memref<8x128xf32, #tpu.memory_space<vmem>>, vector<8x8xf32>,
    %c0_77 = arith.constant 0 : index
    %c72 = arith.constant 72 : index
    %165 = vector.load %arg14[%c0_77, %c72] : memref<8x128xf32, #tpu.memory_space<vmem>>, vector<8x8xf32>
    tpu.vector_store %arg14[%c0_77, %c72], %30 {strides = array<i32>} : memref<8x128xf32, #tpu.memory_space<vmem>>, vector<8x8xf32>,
    %c0_78 = arith.constant 0 : index
    %c80 = arith.constant 80 : index
    %166 = vector.load %arg14[%c0_78, %c80] : memref<8x128xf32, #tpu.memory_space<vmem>>, vector<8x4xf32>
    tpu.vector_store %arg14[%c0_78, %c80], %79 {strides = array<i32>} : memref<8x128xf32, #tpu.memory_space<vmem>>, vector<8x4xf32>,
    %cst_79 = arith.constant 0.000000e+00 : f32
    %167 = vector.broadcast %cst_79 : f32 to vector<8x44xf32>
    %c0_80 = arith.constant 0 : index
    %c84 = arith.constant 84 : index
    %168 = vector.load %arg14[%c0_80, %c84] : memref<8x128xf32, #tpu.memory_space<vmem>>, vector<8x44xf32>
    tpu.vector_store %arg14[%c0_80, %c84], %167 {strides = array<i32>} : memref<8x128xf32, #tpu.memory_space<vmem>>, vector<8x44xf32>,
    return
  }
  func.func @transform_0(%arg0: i32) -> (i32, i32) {
    %c0_i32 = arith.constant 0 : i32
    %c0_i32_0 = arith.constant 0 : i32
    return %arg0, %c0_i32 : i32, i32
  }
  func.func @transform_1(%arg0: i32) -> (i32, i32) {
    %c0_i32 = arith.constant 0 : i32
    %c0_i32_0 = arith.constant 0 : i32
    %c0_i32_1 = arith.constant 0 : i32
    return %c0_i32, %c0_i32_0 : i32, i32
  }
  func.func @transform_2(%arg0: i32) -> (i32, i32) {
    %c0_i32 = arith.constant 0 : i32
    %c0_i32_0 = arith.constant 0 : i32
    %c0_i32_1 = arith.constant 0 : i32
    return %c0_i32, %c0_i32_0 : i32, i32
  }
  func.func @transform_3(%arg0: i32) -> (i32, i32) {
    %c0_i32 = arith.constant 0 : i32
    %c0_i32_0 = arith.constant 0 : i32
    %c0_i32_1 = arith.constant 0 : i32
    return %c0_i32, %c0_i32_0 : i32, i32
  }
  func.func @transform_4(%arg0: i32) -> (i32, i32) {
    %c0_i32 = arith.constant 0 : i32
    %c0_i32_0 = arith.constant 0 : i32
    %c0_i32_1 = arith.constant 0 : i32
    return %c0_i32, %c0_i32_0 : i32, i32
  }
  func.func @transform_5(%arg0: i32) -> (i32, i32) {
    %c0_i32 = arith.constant 0 : i32
    %c0_i32_0 = arith.constant 0 : i32
    %c0_i32_1 = arith.constant 0 : i32
    return %c0_i32, %c0_i32_0 : i32, i32
  }
  func.func @transform_6(%arg0: i32) -> (i32, i32) {
    %c0_i32 = arith.constant 0 : i32
    %c0_i32_0 = arith.constant 0 : i32
    %c0_i32_1 = arith.constant 0 : i32
    return %c0_i32, %c0_i32_0 : i32, i32
  }
  func.func @transform_7(%arg0: i32) -> (i32, i32) {
    %c0_i32 = arith.constant 0 : i32
    %c0_i32_0 = arith.constant 0 : i32
    %c0_i32_1 = arith.constant 0 : i32
    return %c0_i32, %c0_i32_0 : i32, i32
  }
  func.func @transform_8(%arg0: i32) -> (i32, i32) {
    %c0_i32 = arith.constant 0 : i32
    %c0_i32_0 = arith.constant 0 : i32
    %c0_i32_1 = arith.constant 0 : i32
    return %c0_i32, %c0_i32_0 : i32, i32
  }
  func.func @transform_9(%arg0: i32) -> (i32, i32) {
    %c0_i32 = arith.constant 0 : i32
    %c0_i32_0 = arith.constant 0 : i32
    %c0_i32_1 = arith.constant 0 : i32
    return %c0_i32, %c0_i32_0 : i32, i32
  }
  func.func @transform_10(%arg0: i32) -> (i32, i32) {
    %c0_i32 = arith.constant 0 : i32
    %c0_i32_0 = arith.constant 0 : i32
    %c0_i32_1 = arith.constant 0 : i32
    return %c0_i32, %c0_i32_0 : i32, i32
  }
  func.func @transform_11(%arg0: i32) -> (i32, i32) {
    %c0_i32 = arith.constant 0 : i32
    %c0_i32_0 = arith.constant 0 : i32
    %c0_i32_1 = arith.constant 0 : i32
    return %c0_i32, %c0_i32_0 : i32, i32
  }
  func.func @transform_12(%arg0: i32) -> (i32, i32) {
    %c0_i32 = arith.constant 0 : i32
    %c0_i32_0 = arith.constant 0 : i32
    %c0_i32_1 = arith.constant 0 : i32
    return %c0_i32, %c0_i32_0 : i32, i32
  }
  func.func @transform_13(%arg0: i32) -> (i32, i32) {
    %c0_i32 = arith.constant 0 : i32
    %c0_i32_0 = arith.constant 0 : i32
    return %arg0, %c0_i32 : i32, i32
  }
}

</mosaic_0001>

<llo_original>
// kernel: tpu_custom_call.1
$region0: #{tpu_custom_call.1}
  #allocation0 [shape = 'u32[]', space=smem, size = 0x4, offset = 0x4, fixed_abs, tag = 'smem constant byte address 0x4 - core index']
  #allocation1 [shape = 'u32[144,128]{1,0:T(1,128)}', space=vmem, size = 0x12000, scoped, tag = 'internal scratch']
  %s0 = inlined_call_operand.vmem [shape: f32[8,128], index: 0, kind: input, shape index: {}]
  %s1 = inlined_call_operand.vmem [shape: f32[128,1024], index: 1, kind: input, shape index: {}]
  %s2 = inlined_call_operand.hbm [shape: f32[8,1536], index: 2, kind: input, shape index: {}]
  %s3 = inlined_call_operand.hbm [shape: f32[128,128], index: 3, kind: input, shape index: {}]
  %s4 = inlined_call_operand.vmem [shape: f32[128,16], index: 4, kind: input, shape index: {}]
  %s5 = inlined_call_operand.hbm [shape: f32[128,128], index: 5, kind: input, shape index: {}]
  %s6 = inlined_call_operand.vmem [shape: f32[1,128], index: 6, kind: input, shape index: {}]
  %s7 = inlined_call_operand.vmem [shape: f32[128,4], index: 7, kind: input, shape index: {}]
  %s8 = inlined_call_operand.vmem [shape: f32[1,4], index: 8, kind: input, shape index: {}]
  %s9 = inlined_call_operand.hbm [shape: f32[512,128], index: 9, kind: input, shape index: {}]
  %s10 = inlined_call_operand.vmem [shape: f32[1,512], index: 10, kind: input, shape index: {}]
  %s11 = inlined_call_operand.vmem [shape: f32[512,64], index: 11, kind: input, shape index: {}]
  %s12 = inlined_call_operand.vmem [shape: f32[1,64], index: 12, kind: input, shape index: {}]
  %s13 = inlined_call_operand.hbm [shape: f32[8,128], index: 13, kind: output, shape index: {}]
  %s14 = sld [smem:[#allocation0]]
  $region78: #{tpu_custom_call.1} parent=0
    _
  %s16 = ssub.s32 1, %s14
  %s17 = scalar_select 0, %s16, %s14
  $region1: #{tpu_custom_call.1} parent=0
    #allocation2 [shape = 'u8[49152]{0}', space=vmem, size = 0xc000, scoped, tag = 'input window, operand 2, single buffered']
    #allocation3 [shape = 's32[1]{0}', space=sflag, size = 0x4, scoped, tag = 'scoped memory for tpu_custom_call.1']
    #allocation4 [shape = 's32[1]{0}', space=sflag, size = 0x4, scoped, tag = 'scoped memory for tpu_custom_call.1']
    #allocation5 [shape = 'u8[65536]{0}', space=vmem, size = 0x10000, scoped, tag = 'input window, operand 3, single buffered']
    #allocation6 [shape = 's32[1]{0}', space=sflag, size = 0x4, scoped, tag = 'scoped memory for tpu_custom_call.1']
    #allocation7 [shape = 'u8[65536]{0}', space=vmem, size = 0x10000, scoped, tag = 'input window, operand 5, single buffered']
    #allocation8 [shape = 'u8[262144]{0}', space=vmem, size = 0x40000, scoped, tag = 'input window, operand 9, single buffered']
    #allocation9 [shape = 's32[1]{0}', space=sflag, size = 0x4, scoped, tag = 'scoped memory for tpu_custom_call.1']
    #allocation10 [shape = 'u8[4096]{0}', space=vmem, size = 0x1000, scoped, tag = 'output window, operand 0, single buffered']
    %18 = vsyncpa [#allocation3], 0
    %19 = vsyncpa [#allocation6], 0
    %20 = vsyncpa [#allocation9], 0
    %21 = vsyncpa [#allocation4], 0
    // Predicated region
    $region2: #{tpu_custom_call.1} parent=1 // pred_check
      _
    $region3: #{tpu_custom_call.1} parent=1 // pred_check_branch
      %23 = sbr.rel (0) target = $region5
    $region4: #{tpu_custom_call.1} parent=1 // pred_region
      _
    $region5: #{tpu_custom_call.1} parent=1 // pred_fallthru
      _
    // Predicated region
    $region6: #{tpu_custom_call.1} parent=1 // pred_check
      _
    $region7: #{tpu_custom_call.1} parent=1 // pred_check_branch
      %25 = sbr.rel (0) target = $region9
    $region8: #{tpu_custom_call.1} parent=1 // pred_region
      _
    $region9: #{tpu_custom_call.1} parent=1 // pred_fallthru
      _
    // Predicated region
    $region10: #{tpu_custom_call.1} parent=1 // pred_check
      _
    $region11: #{tpu_custom_call.1} parent=1 // pred_check_branch
      %27 = sbr.rel (0) target = $region13
    $region12: #{tpu_custom_call.1} parent=1 // pred_region
      %s29 = ssub.s32 1536, 1536
      %30 = vsyncadd [#allocation3], %s29
      %s32 = sshll.u32 [#allocation2], 4
      %s33 = int_to_ptr.vmem [resolvable:$true] %s32
      %35 = dma.hbm_to_vmem [thread:$0]  %s2, 1536, %s33, [#allocation3]
    $region13: #{tpu_custom_call.1} parent=1 // pred_fallthru
      _
    // Predicated region
    $region14: #{tpu_custom_call.1} parent=1 // pred_check
      _
    $region15: #{tpu_custom_call.1} parent=1 // pred_check_branch
      %37 = sbr.rel (0) target = $region17
    $region16: #{tpu_custom_call.1} parent=1 // pred_region
      %s39 = ssub.s32 2048, 2048
      %40 = vsyncadd [#allocation6], %s39
      %s41 = sshll.u32 [#allocation5], 4
      %s42 = int_to_ptr.vmem [resolvable:$true] %s41
      %47 = dma.hbm_to_vmem [thread:$0]  %s3, 2048, %s42, [#allocation6], 128, 128, 8
    $region17: #{tpu_custom_call.1} parent=1 // pred_fallthru
      _
    // Predicated region
    $region18: #{tpu_custom_call.1} parent=1 // pred_check
      _
    $region19: #{tpu_custom_call.1} parent=1 // pred_check_branch
      %49 = sbr.rel (0) target = $region21
    $region20: #{tpu_custom_call.1} parent=1 // pred_region
      _
    $region21: #{tpu_custom_call.1} parent=1 // pred_fallthru
      _
    // Predicated region
    $region22: #{tpu_custom_call.1} parent=1 // pred_check
      _
    $region23: #{tpu_custom_call.1} parent=1 // pred_check_branch
      %51 = sbr.rel (0) target = $region25
    $region24: #{tpu_custom_call.1} parent=1 // pred_region
      %s53 = ssub.s32 2048, 2048
      %54 = vsyncadd [#allocation6], %s53
      %s55 = sshll.u32 [#allocation7], 4
      %s56 = int_to_ptr.vmem [resolvable:$true] %s55
      %61 = dma.hbm_to_vmem [thread:$0]  %s5, 2048, %s56, [#allocation6], 128, 128, 8
    $region25: #{tpu_custom_call.1} parent=1 // pred_fallthru
      _
    // Predicated region
    $region26: #{tpu_custom_call.1} parent=1 // pred_check
      _
    $region27: #{tpu_custom_call.1} parent=1 // pred_check_branch
      %63 = sbr.rel (0) target = $region29
    $region28: #{tpu_custom_call.1} parent=1 // pred_region
      _
    $region29: #{tpu_custom_call.1} parent=1 // pred_fallthru
      _
    // Predicated region
    $region30: #{tpu_custom_call.1} parent=1 // pred_check
      _
    $region31: #{tpu_custom_call.1} parent=1 // pred_check_branch
      %65 = sbr.rel (0) target = $region33
    $region32: #{tpu_custom_call.1} parent=1 // pred_region
      _
    $region33: #{tpu_custom_call.1} parent=1 // pred_fallthru
      _
    // Predicated region
    $region34: #{tpu_custom_call.1} parent=1 // pred_check
      _
    $region35: #{tpu_custom_call.1} parent=1 // pred_check_branch
      %67 = sbr.rel (0) target = $region37
    $region36: #{tpu_custom_call.1} parent=1 // pred_region
      _
    $region37: #{tpu_custom_call.1} parent=1 // pred_fallthru
      _
    // Predicated region
    $region38: #{tpu_custom_call.1} parent=1 // pred_check
      _
    $region39: #{tpu_custom_call.1} parent=1 // pred_check_branch
      %69 = sbr.rel (0) target = $region41
    $region40: #{tpu_custom_call.1} parent=1 // pred_region
      %s71 = ssub.s32 8192, 8192
      %72 = vsyncadd [#allocation9], %s71
      %s73 = sshll.u32 [#allocation8], 4
      %s74 = int_to_ptr.vmem [resolvable:$true] %s73
      %79 = dma.hbm_to_vmem [thread:$0]  %s9, 8192, %s74, [#allocation9], 128, 128, 8
    $region41: #{tpu_custom_call.1} parent=1 // pred_fallthru
      _
    // Predicated region
    $region42: #{tpu_custom_call.1} parent=1 // pred_check
      _
    $region43: #{tpu_custom_call.1} parent=1 // pred_check_branch
      %81 = sbr.rel (0) target = $region45
    $region44: #{tpu_custom_call.1} parent=1 // pred_region
      _
    $region45: #{tpu_custom_call.1} parent=1 // pred_fallthru
      _
    // Predicated region
    $region46: #{tpu_custom_call.1} parent=1 // pred_check
      _
    $region47: #{tpu_custom_call.1} parent=1 // pred_check_branch
      %83 = sbr.rel (0) target = $region49
    $region48: #{tpu_custom_call.1} parent=1 // pred_region
      _
    $region49: #{tpu_custom_call.1} parent=1 // pred_fallthru
      _
    // Predicated region
    $region50: #{tpu_custom_call.1} parent=1 // pred_check
      _
    $region51: #{tpu_custom_call.1} parent=1 // pred_check_branch
      %85 = sbr.rel (0) target = $region53
    $region52: #{tpu_custom_call.1} parent=1 // pred_region
      _
    $region53: #{tpu_custom_call.1} parent=1 // pred_fallthru
      _
    // Predicated region
    $region54: #{tpu_custom_call.1} parent=1 // pred_check
      _
    $region55: #{tpu_custom_call.1} parent=1 // pred_check_branch
      %87 = sbr.rel (0) target = $region57
    $region56: #{tpu_custom_call.1} parent=1 // pred_region
      %88 = dma.done [#allocation3], 1536
    $region57: #{tpu_custom_call.1} parent=1 // pred_fallthru
      _
    // Predicated region
    $region58: #{tpu_custom_call.1} parent=1 // pred_check
      _
    $region59: #{tpu_custom_call.1} parent=1 // pred_check_branch
      %90 = sbr.rel (0) target = $region61
    $region60: #{tpu_custom_call.1} parent=1 // pred_region
      %91 = dma.done [#allocation6], 2048
    $region61: #{tpu_custom_call.1} parent=1 // pred_fallthru
      _
    // Predicated region
    $region62: #{tpu_custom_call.1} parent=1 // pred_check
      _
    $region63: #{tpu_custom_call.1} parent=1 // pred_check_branch
      %93 = sbr.rel (0) target = $region65
    $region64: #{tpu_custom_call.1} parent=1 // pred_region
      %94 = dma.done [#allocation6], 2048
    $region65: #{tpu_custom_call.1} parent=1 // pred_fallthru
      _
    // Predicated region
    $region66: #{tpu_custom_call.1} parent=1 // pred_check
      _
    $region67: #{tpu_custom_call.1} parent=1 // pred_check_branch
      %96 = sbr.rel (0) target = $region69
    $region68: #{tpu_custom_call.1} parent=1 // pred_region
      %97 = dma.done [#allocation9], 8192
    $region69: #{tpu_custom_call.1} parent=1 // pred_fallthru
      _
    %v98 = vld [vmem:[%s0] sm:$0xff]
    %v99 = vld [vmem:[%s1] sm:$0xff]
    %v100 = vld [vmem:[%s1 + $0x8] sm:$0xff]
    %v101 = vld [vmem:[%s1 + $0x10] sm:$0xff]
    %v102 = vld [vmem:[%s1 + $0x18] sm:$0xff]
    %v103 = vld [vmem:[%s1 + $0x20] sm:$0xff]
    %v104 = vld [vmem:[%s1 + $0x28] sm:$0xff]
    %v105 = vld [vmem:[%s1 + $0x30] sm:$0xff]
    %v106 = vld [vmem:[%s1 + $0x38] sm:$0xff]
    %v107 = vld [vmem:[%s1 + $0x40] sm:$0xff]
    %v108 = vld [vmem:[%s1 + $0x48] sm:$0xff]
    %v109 = vld [vmem:[%s1 + $0x50] sm:$0xff]
    %v110 = vld [vmem:[%s1 + $0x58] sm:$0xff]
    %v111 = vld [vmem:[%s1 + $0x60] sm:$0xff]
    %v112 = vld [vmem:[%s1 + $0x68] sm:$0xff]
    %v113 = vld [vmem:[%s1 + $0x70] sm:$0xff]
    %v114 = vld [vmem:[%s1 + $0x78] sm:$0xff]
    %v115 = vld [vmem:[%s1 + $0x80] sm:$0xff]
    %v116 = vld [vmem:[%s1 + $0x88] sm:$0xff]
    %v117 = vld [vmem:[%s1 + $0x90] sm:$0xff]
    %v118 = vld [vmem:[%s1 + $0x98] sm:$0xff]
    %v119 = vld [vmem:[%s1 + $0xa0] sm:$0xff]
    %v120 = vld [vmem:[%s1 + $0xa8] sm:$0xff]
    %v121 = vld [vmem:[%s1 + $0xb0] sm:$0xff]
    %v122 = vld [vmem:[%s1 + $0xb8] sm:$0xff]
    %v123 = vld [vmem:[%s1 + $0xc0] sm:$0xff]
    %v124 = vld [vmem:[%s1 + $0xc8] sm:$0xff]
    %v125 = vld [vmem:[%s1 + $0xd0] sm:$0xff]
    %v126 = vld [vmem:[%s1 + $0xd8] sm:$0xff]
    %v127 = vld [vmem:[%s1 + $0xe0] sm:$0xff]
    %v128 = vld [vmem:[%s1 + $0xe8] sm:$0xff]
    %v129 = vld [vmem:[%s1 + $0xf0] sm:$0xff]
    %v130 = vld [vmem:[%s1 + $0xf8] sm:$0xff]
    %v131 = vld [vmem:[%s1 + $0x100] sm:$0xff]
    %v132 = vld [vmem:[%s1 + $0x108] sm:$0xff]
    %v133 = vld [vmem:[%s1 + $0x110] sm:$0xff]
    %v134 = vld [vmem:[%s1 + $0x118] sm:$0xff]
    %v135 = vld [vmem:[%s1 + $0x120] sm:$0xff]
    %v136 = vld [vmem:[%s1 + $0x128] sm:$0xff]
    %v137 = vld [vmem:[%s1 + $0x130] sm:$0xff]
    %v138 = vld [vmem:[%s1 + $0x138] sm:$0xff]
    %v139 = vld [vmem:[%s1 + $0x140] sm:$0xff]
    %v140 = vld [vmem:[%s1 + $0x148] sm:$0xff]
    %v141 = vld [vmem:[%s1 + $0x150] sm:$0xff]
    %v142 = vld [vmem:[%s1 + $0x158] sm:$0xff]
    %v143 = vld [vmem:[%s1 + $0x160] sm:$0xff]
    %v144 = vld [vmem:[%s1 + $0x168] sm:$0xff]
    %v145 = vld [vmem:[%s1 + $0x170] sm:$0xff]
    %v146 = vld [vmem:[%s1 + $0x178] sm:$0xff]
    %v147 = vld [vmem:[%s1 + $0x180] sm:$0xff]
    %v148 = vld [vmem:[%s1 + $0x188] sm:$0xff]
    %v149 = vld [vmem:[%s1 + $0x190] sm:$0xff]
    %v150 = vld [vmem:[%s1 + $0x198] sm:$0xff]
    %v151 = vld [vmem:[%s1 + $0x1a0] sm:$0xff]
    %v152 = vld [vmem:[%s1 + $0x1a8] sm:$0xff]
    %v153 = vld [vmem:[%s1 + $0x1b0] sm:$0xff]
    %v154 = vld [vmem:[%s1 + $0x1b8] sm:$0xff]
    %v155 = vld [vmem:[%s1 + $0x1c0] sm:$0xff]
    %v156 = vld [vmem:[%s1 + $0x1c8] sm:$0xff]
    %v157 = vld [vmem:[%s1 + $0x1d0] sm:$0xff]
    %v158 = vld [vmem:[%s1 + $0x1d8] sm:$0xff]
    %v159 = vld [vmem:[%s1 + $0x1e0] sm:$0xff]
    %v160 = vld [vmem:[%s1 + $0x1e8] sm:$0xff]
    %v161 = vld [vmem:[%s1 + $0x1f0] sm:$0xff]
    %v162 = vld [vmem:[%s1 + $0x1f8] sm:$0xff]
    %v163 = vld [vmem:[%s1 + $0x200] sm:$0xff]
    %v164 = vld [vmem:[%s1 + $0x208] sm:$0xff]
    %v165 = vld [vmem:[%s1 + $0x210] sm:$0xff]
    %v166 = vld [vmem:[%s1 + $0x218] sm:$0xff]
    %v167 = vld [vmem:[%s1 + $0x220] sm:$0xff]
    %v168 = vld [vmem:[%s1 + $0x228] sm:$0xff]
    %v169 = vld [vmem:[%s1 + $0x230] sm:$0xff]
    %v170 = vld [vmem:[%s1 + $0x238] sm:$0xff]
    %v171 = vld [vmem:[%s1 + $0x240] sm:$0xff]
    %v172 = vld [vmem:[%s1 + $0x248] sm:$0xff]
    %v173 = vld [vmem:[%s1 + $0x250] sm:$0xff]
    %v174 = vld [vmem:[%s1 + $0x258] sm:$0xff]
    %v175 = vld [vmem:[%s1 + $0x260] sm:$0xff]
    %v176 = vld [vmem:[%s1 + $0x268] sm:$0xff]
    %v177 = vld [vmem:[%s1 + $0x270] sm:$0xff]
    %v178 = vld [vmem:[%s1 + $0x278] sm:$0xff]
    %v179 = vld [vmem:[%s1 + $0x280] sm:$0xff]
    %v180 = vld [vmem:[%s1 + $0x288] sm:$0xff]
    %v181 = vld [vmem:[%s1 + $0x290] sm:$0xff]
    %v182 = vld [vmem:[%s1 + $0x298] sm:$0xff]
    %v183 = vld [vmem:[%s1 + $0x2a0] sm:$0xff]
    %v184 = vld [vmem:[%s1 + $0x2a8] sm:$0xff]
    %v185 = vld [vmem:[%s1 + $0x2b0] sm:$0xff]
    %v186 = vld [vmem:[%s1 + $0x2b8] sm:$0xff]
    %v187 = vld [vmem:[%s1 + $0x2c0] sm:$0xff]
    %v188 = vld [vmem:[%s1 + $0x2c8] sm:$0xff]
    %v189 = vld [vmem:[%s1 + $0x2d0] sm:$0xff]
    %v190 = vld [vmem:[%s1 + $0x2d8] sm:$0xff]
    %v191 = vld [vmem:[%s1 + $0x2e0] sm:$0xff]
    %v192 = vld [vmem:[%s1 + $0x2e8] sm:$0xff]
    %v193 = vld [vmem:[%s1 + $0x2f0] sm:$0xff]
    %v194 = vld [vmem:[%s1 + $0x2f8] sm:$0xff]
    %v195 = vld [vmem:[%s1 + $0x300] sm:$0xff]
    %v196 = vld [vmem:[%s1 + $0x308] sm:$0xff]
    %v197 = vld [vmem:[%s1 + $0x310] sm:$0xff]
    %v198 = vld [vmem:[%s1 + $0x318] sm:$0xff]
    %v199 = vld [vmem:[%s1 + $0x320] sm:$0xff]
    %v200 = vld [vmem:[%s1 + $0x328] sm:$0xff]
    %v201 = vld [vmem:[%s1 + $0x330] sm:$0xff]
    %v202 = vld [vmem:[%s1 + $0x338] sm:$0xff]
    %v203 = vld [vmem:[%s1 + $0x340] sm:$0xff]
    %v204 = vld [vmem:[%s1 + $0x348] sm:$0xff]
    %v205 = vld [vmem:[%s1 + $0x350] sm:$0xff]
    %v206 = vld [vmem:[%s1 + $0x358] sm:$0xff]
    %v207 = vld [vmem:[%s1 + $0x360] sm:$0xff]
    %v208 = vld [vmem:[%s1 + $0x368] sm:$0xff]
    %v209 = vld [vmem:[%s1 + $0x370] sm:$0xff]
    %v210 = vld [vmem:[%s1 + $0x378] sm:$0xff]
    %v211 = vld [vmem:[%s1 + $0x380] sm:$0xff]
    %v212 = vld [vmem:[%s1 + $0x388] sm:$0xff]
    %v213 = vld [vmem:[%s1 + $0x390] sm:$0xff]
    %v214 = vld [vmem:[%s1 + $0x398] sm:$0xff]
    %v215 = vld [vmem:[%s1 + $0x3a0] sm:$0xff]
    %v216 = vld [vmem:[%s1 + $0x3a8] sm:$0xff]
    %v217 = vld [vmem:[%s1 + $0x3b0] sm:$0xff]
    %v218 = vld [vmem:[%s1 + $0x3b8] sm:$0xff]
    %v219 = vld [vmem:[%s1 + $0x3c0] sm:$0xff]
    %v220 = vld [vmem:[%s1 + $0x3c8] sm:$0xff]
    %v221 = vld [vmem:[%s1 + $0x3d0] sm:$0xff]
    %v222 = vld [vmem:[%s1 + $0x3d8] sm:$0xff]
    %v223 = vld [vmem:[%s1 + $0x3e0] sm:$0xff]
    %v224 = vld [vmem:[%s1 + $0x3e8] sm:$0xff]
    %v225 = vld [vmem:[%s1 + $0x3f0] sm:$0xff]
    %v226 = vld [vmem:[%s1 + $0x3f8] sm:$0xff]
    %227 = vmatprep.subr.mxu0 %v100
    %228 = vmatpush1.msra.mxu0 %v99
    %229 = vmatprep.subr.mxu0 %v108
    %230 = vmatpush1.msra.mxu0 %v107
    %231 = vmatprep.subr.mxu0 %v116
    %232 = vmatpush1.msra.mxu0 %v115
    %233 = vmatprep.subr.mxu0 %v124
    %234 = vmatpush1.msra.mxu0 %v123
    %235 = vmatprep.subr.mxu0 %v132
    %236 = vmatpush1.msra.mxu0 %v131
    %237 = vmatprep.subr.mxu0 %v140
    %238 = vmatpush1.msra.mxu0 %v139
    %239 = vmatprep.subr.mxu0 %v148
    %240 = vmatpush1.msra.mxu0 %v147
    %241 = vmatprep.subr.mxu0 %v156
    %242 = vmatpush1.msra.mxu0 %v155
    %243 = vmatprep.subr.mxu0 %v164
    %244 = vmatpush1.msra.mxu0 %v163
    %245 = vmatprep.subr.mxu0 %v172
    %246 = vmatpush1.msra.mxu0 %v171
    %247 = vmatprep.subr.mxu0 %v180
    %248 = vmatpush1.msra.mxu0 %v179
    %249 = vmatprep.subr.mxu0 %v188
    %250 = vmatpush1.msra.mxu0 %v187
    %251 = vmatprep.subr.mxu0 %v196
    %252 = vmatpush1.msra.mxu0 %v195
    %253 = vmatprep.subr.mxu0 %v204
    %254 = vmatpush1.msra.mxu0 %v203
    %255 = vmatprep.subr.mxu0 %v212
    %256 = vmatpush1.msra.mxu0 %v211
    %257 = vmatprep.subr.mxu0 %v220
    %258 = vmatpush1.msra.mxu0 %v219
    %259 = vmatprep.subr.mxu0 0.0
    %260 = vmatpush1.msra.mxu0 0.0
    %261 = vmatprep.subr.mxu0 0.0
    %262 = vmatpush1.msra.mxu0 0.0
    %263 = vmatprep.subr.mxu0 0.0
    %264 = vmatpush1.msra.mxu0 0.0
    %265 = vmatprep.subr.mxu0 0.0
    %266 = vmatpush1.msra.mxu0 0.0
    %267 = vmatprep.subr.mxu0 0.0
    %268 = vmatpush1.msra.mxu0 0.0
    %269 = vmatprep.subr.mxu0 0.0
    %270 = vmatpush1.msra.mxu0 0.0
    %271 = vmatprep.subr.mxu0 0.0
    %272 = vmatpush1.msra.mxu0 0.0
    %273 = vmatprep.subr.mxu0 0.0
    %274 = vmatpush1.msra.mxu0 0.0
    %275 = vmatprep.subr.mxu0 0.0
    %276 = vmatpush1.msra.mxu0 0.0
    %277 = vmatprep.subr.mxu0 0.0
    %278 = vmatpush1.msra.mxu0 0.0
    %279 = vmatprep.subr.mxu0 0.0
    %280 = vmatpush1.msra.mxu0 0.0
    %281 = vmatprep.subr.mxu0 0.0
    %282 = vmatpush1.msra.mxu0 0.0
    %283 = vmatprep.subr.mxu0 0.0
    %284 = vmatpush1.msra.mxu0 0.0
    %285 = vmatprep.subr.mxu0 0.0
    %286 = vmatpush1.msra.mxu0 0.0
    %287 = vmatprep.subr.mxu0 0.0
    %288 = vmatpush1.msra.mxu0 0.0
    %289 = vmatprep.subr.mxu0 0.0
    %290 = vmatpush1.msra.mxu0 0.0
    %291 = vmatprep.mubr.f32.mxu0 0.0
    %292 = vmatmul.mubr.f32.gmra.mrb[0].mxu0 %v98
    %v293 = vpop.f32.mrb[0].mxu0
    %v294 = vadd.f32 0.0, %v293
    %v295 = vpop.f32.mrb[0].mxu0
    %v296 = vadd.f32 0.0, %v295
    %297 = vdwg.mxu0
    %298 = vmatprep.subr.mxu0 %v102
    %299 = vmatpush1.msra.mxu0 %v101
    %300 = vmatprep.subr.mxu0 %v110
    %301 = vmatpush1.msra.mxu0 %v109
    %302 = vmatprep.subr.mxu0 %v118
    %303 = vmatpush1.msra.mxu0 %v117
    %304 = vmatprep.subr.mxu0 %v126
    %305 = vmatpush1.msra.mxu0 %v125
    %306 = vmatprep.subr.mxu0 %v134
    %307 = vmatpush1.msra.mxu0 %v133
    %308 = vmatprep.subr.mxu0 %v142
    %309 = vmatpush1.msra.mxu0 %v141
    %310 = vmatprep.subr.mxu0 %v150
    %311 = vmatpush1.msra.mxu0 %v149
    %312 = vmatprep.subr.mxu0 %v158
    %313 = vmatpush1.msra.mxu0 %v157
    %314 = vmatprep.subr.mxu0 %v166
    %315 = vmatpush1.msra.mxu0 %v165
    %316 = vmatprep.subr.mxu0 %v174
    %317 = vmatpush1.msra.mxu0 %v173
    %318 = vmatprep.subr.mxu0 %v182
    %319 = vmatpush1.msra.mxu0 %v181
    %320 = vmatprep.subr.mxu0 %v190
    %321 = vmatpush1.msra.mxu0 %v189
    %322 = vmatprep.subr.mxu0 %v198
    %323 = vmatpush1.msra.mxu0 %v197
    %324 = vmatprep.subr.mxu0 %v206
    %325 = vmatpush1.msra.mxu0 %v205
    %326 = vmatprep.subr.mxu0 %v214
    %327 = vmatpush1.msra.mxu0 %v213
    %328 = vmatprep.subr.mxu0 %v222
    %329 = vmatpush1.msra.mxu0 %v221
    %330 = vmatprep.subr.mxu0 0.0
    %331 = vmatpush1.msra.mxu0 0.0
    %332 = vmatprep.subr.mxu0 0.0
    %333 = vmatpush1.msra.mxu0 0.0
    %334 = vmatprep.subr.mxu0 0.0
    %335 = vmatpush1.msra.mxu0 0.0
    %336 = vmatprep.subr.mxu0 0.0
    %337 = vmatpush1.msra.mxu0 0.0
    %338 = vmatprep.subr.mxu0 0.0
    %339 = vmatpush1.msra.mxu0 0.0
    %340 = vmatprep.subr.mxu0 0.0
    %341 = vmatpush1.msra.mxu0 0.0
    %342 = vmatprep.subr.mxu0 0.0
    %343 = vmatpush1.msra.mxu0 0.0
    %344 = vmatprep.subr.mxu0 0.0
    %345 = vmatpush1.msra.mxu0 0.0
    %346 = vmatprep.subr.mxu0 0.0
    %347 = vmatpush1.msra.mxu0 0.0
    %348 = vmatprep.subr.mxu0 0.0
    %349 = vmatpush1.msra.mxu0 0.0
    %350 = vmatprep.subr.mxu0 0.0
    %351 = vmatpush1.msra.mxu0 0.0
    %352 = vmatprep.subr.mxu0 0.0
    %353 = vmatpush1.msra.mxu0 0.0
    %354 = vmatprep.subr.mxu0 0.0
    %355 = vmatpush1.msra.mxu0 0.0
    %356 = vmatprep.subr.mxu0 0.0
    %357 = vmatpush1.msra.mxu0 0.0
    %358 = vmatprep.subr.mxu0 0.0
    %359 = vmatpush1.msra.mxu0 0.0
    %360 = vmatprep.subr.mxu0 0.0
    %361 = vmatpush1.msra.mxu0 0.0
    %362 = vmatprep.mubr.f32.mxu0 0.0
    %363 = vmatmul.mubr.f32.gmra.mrb[0].mxu0 %v98
    %v364 = vpop.f32.mrb[0].mxu0
    %v365 = vadd.f32 0.0, %v364
    %v366 = vpop.f32.mrb[0].mxu0
    %v367 = vadd.f32 0.0, %v366
    %368 = vdwg.mxu0
    %369 = vmatprep.subr.mxu0 %v104
    %370 = vmatpush1.msra.mxu0 %v103
    %371 = vmatprep.subr.mxu0 %v112
    %372 = vmatpush1.msra.mxu0 %v111
    %373 = vmatprep.subr.mxu0 %v120
    %374 = vmatpush1.msra.mxu0 %v119
    %375 = vmatprep.subr.mxu0 %v128
    %376 = vmatpush1.msra.mxu0 %v127
    %377 = vmatprep.subr.mxu0 %v136
    %378 = vmatpush1.msra.mxu0 %v135
    %379 = vmatprep.subr.mxu0 %v144
    %380 = vmatpush1.msra.mxu0 %v143
    %381 = vmatprep.subr.mxu0 %v152
    %382 = vmatpush1.msra.mxu0 %v151
    %383 = vmatprep.subr.mxu0 %v160
    %384 = vmatpush1.msra.mxu0 %v159
    %385 = vmatprep.subr.mxu0 %v168
    %386 = vmatpush1.msra.mxu0 %v167
    %387 = vmatprep.subr.mxu0 %v176
    %388 = vmatpush1.msra.mxu0 %v175
    %389 = vmatprep.subr.mxu0 %v184
    %390 = vmatpush1.msra.mxu0 %v183
    %391 = vmatprep.subr.mxu0 %v192
    %392 = vmatpush1.msra.mxu0 %v191
    %393 = vmatprep.subr.mxu0 %v200
    %394 = vmatpush1.msra.mxu0 %v199
    %395 = vmatprep.subr.mxu0 %v208
    %396 = vmatpush1.msra.mxu0 %v207
    %397 = vmatprep.subr.mxu0 %v216
    %398 = vmatpush1.msra.mxu0 %v215
    %399 = vmatprep.subr.mxu0 %v224
    %400 = vmatpush1.msra.mxu0 %v223
    %401 = vmatprep.subr.mxu0 0.0
    %402 = vmatpush1.msra.mxu0 0.0
    %403 = vmatprep.subr.mxu0 0.0
    %404 = vmatpush1.msra.mxu0 0.0
    %405 = vmatprep.subr.mxu0 0.0
    %406 = vmatpush1.msra.mxu0 0.0
    %407 = vmatprep.subr.mxu0 0.0
    %408 = vmatpush1.msra.mxu0 0.0
    %409 = vmatprep.subr.mxu0 0.0
    %410 = vmatpush1.msra.mxu0 0.0
    %411 = vmatprep.subr.mxu0 0.0
    %412 = vmatpush1.msra.mxu0 0.0
    %413 = vmatprep.subr.mxu0 0.0
    %414 = vmatpush1.msra.mxu0 0.0
    %415 = vmatprep.subr.mxu0 0.0
    %416 = vmatpush1.msra.mxu0 0.0
    %417 = vmatprep.subr.mxu0 0.0
    %418 = vmatpush1.msra.mxu0 0.0
    %419 = vmatprep.subr.mxu0 0.0
    %420 = vmatpush1.msra.mxu0 0.0
    %421 = vmatprep.subr.mxu0 0.0
    %422 = vmatpush1.msra.mxu0 0.0
    %423 = vmatprep.subr.mxu0 0.0
    %424 = vmatpush1.msra.mxu0 0.0
    %425 = vmatprep.subr.mxu0 0.0
    %426 = vmatpush1.msra.mxu0 0.0
    %427 = vmatprep.subr.mxu0 0.0
    %428 = vmatpush1.msra.mxu0 0.0
    %429 = vmatprep.subr.mxu0 0.0
    %430 = vmatpush1.msra.mxu0 0.0
    %431 = vmatprep.subr.mxu0 0.0
    %432 = vmatpush1.msra.mxu0 0.0
    %433 = vmatprep.mubr.f32.mxu0 0.0
    %434 = vmatmul.mubr.f32.gmra.mrb[0].mxu0 %v98
    %v435 = vpop.f32.mrb[0].mxu0
    %v436 = vadd.f32 0.0, %v435
    %v437 = vpop.f32.mrb[0].mxu0
    %v438 = vadd.f32 0.0, %v437
    %439 = vdwg.mxu0
    %440 = vmatprep.subr.mxu0 %v106
    %441 = vmatpush1.msra.mxu0 %v105
    %442 = vmatprep.subr.mxu0 %v114
    %443 = vmatpush1.msra.mxu0 %v113
    %444 = vmatprep.subr.mxu0 %v122
    %445 = vmatpush1.msra.mxu0 %v121
    %446 = vmatprep.subr.mxu0 %v130
    %447 = vmatpush1.msra.mxu0 %v129
    %448 = vmatprep.subr.mxu0 %v138
    %449 = vmatpush1.msra.mxu0 %v137
    %450 = vmatprep.subr.mxu0 %v146
    %451 = vmatpush1.msra.mxu0 %v145
    %452 = vmatprep.subr.mxu0 %v154
    %453 = vmatpush1.msra.mxu0 %v153
    %454 = vmatprep.subr.mxu0 %v162
    %455 = vmatpush1.msra.mxu0 %v161
    %456 = vmatprep.subr.mxu0 %v170
    %457 = vmatpush1.msra.mxu0 %v169
    %458 = vmatprep.subr.mxu0 %v178
    %459 = vmatpush1.msra.mxu0 %v177
    %460 = vmatprep.subr.mxu0 %v186
    %461 = vmatpush1.msra.mxu0 %v185
    %462 = vmatprep.subr.mxu0 %v194
    %463 = vmatpush1.msra.mxu0 %v193
    %464 = vmatprep.subr.mxu0 %v202
    %465 = vmatpush1.msra.mxu0 %v201
    %466 = vmatprep.subr.mxu0 %v210
    %467 = vmatpush1.msra.mxu0 %v209
    %468 = vmatprep.subr.mxu0 %v218
    %469 = vmatpush1.msra.mxu0 %v217
    %470 = vmatprep.subr.mxu0 %v226
    %471 = vmatpush1.msra.mxu0 %v225
    %472 = vmatprep.subr.mxu0 0.0
    %473 = vmatpush1.msra.mxu0 0.0
    %474 = vmatprep.subr.mxu0 0.0
    %475 = vmatpush1.msra.mxu0 0.0
    %476 = vmatprep.subr.mxu0 0.0
    %477 = vmatpush1.msra.mxu0 0.0
    %478 = vmatprep.subr.mxu0 0.0
    %479 = vmatpush1.msra.mxu0 0.0
    %480 = vmatprep.subr.mxu0 0.0
    %481 = vmatpush1.msra.mxu0 0.0
    %482 = vmatprep.subr.mxu0 0.0
    %483 = vmatpush1.msra.mxu0 0.0
    %484 = vmatprep.subr.mxu0 0.0
    %485 = vmatpush1.msra.mxu0 0.0
    %486 = vmatprep.subr.mxu0 0.0
    %487 = vmatpush1.msra.mxu0 0.0
    %488 = vmatprep.subr.mxu0 0.0
    %489 = vmatpush1.msra.mxu0 0.0
    %490 = vmatprep.subr.mxu0 0.0
    %491 = vmatpush1.msra.mxu0 0.0
    %492 = vmatprep.subr.mxu0 0.0
    %493 = vmatpush1.msra.mxu0 0.0
    %494 = vmatprep.subr.mxu0 0.0
    %495 = vmatpush1.msra.mxu0 0.0
    %496 = vmatprep.subr.mxu0 0.0
    %497 = vmatpush1.msra.mxu0 0.0
    %498 = vmatprep.subr.mxu0 0.0
    %499 = vmatpush1.msra.mxu0 0.0
    %500 = vmatprep.subr.mxu0 0.0
    %501 = vmatpush1.msra.mxu0 0.0
    %502 = vmatprep.subr.mxu0 0.0
    %503 = vmatpush1.msra.mxu0 0.0
    %504 = vmatprep.mubr.f32.mxu0 0.0
    %505 = vmatmul.mubr.f32.gmra.mrb[0].mxu0 %v98
    %v506 = vpop.f32.mrb[0].mxu0
    %v507 = vadd.f32 0.0, %v506
    %v508 = vpop.f32.mrb[0].mxu0
    %v509 = vadd.f32 0.0, %v508
    %510 = vdwg.mxu0
    %vm511 = vcmp.gt.f32.partialorder %v294, 0.0
    %v512 = vmin.f32 %v294, 0.0
    %v513 = vmul.f32 %v512, 1.442695
    %v514 = vpow.pop %v513
    %v515 = vsub.f32 %v514, 1.0
    %v516 = vsel %vm511, %v294, %v515
    %v517 = vld [vmem:[#allocation5] sm:$0xff]
    %v518 = vld [vmem:[#allocation5 + $0x8] sm:$0xff]
    %v519 = vld [vmem:[#allocation5 + $0x10] sm:$0xff]
    %v520 = vld [vmem:[#allocation5 + $0x18] sm:$0xff]
    %v521 = vld [vmem:[#allocation5 + $0x20] sm:$0xff]
    %v522 = vld [vmem:[#allocation5 + $0x28] sm:$0xff]
    %v523 = vld [vmem:[#allocation5 + $0x30] sm:$0xff]
    %v524 = vld [vmem:[#allocation5 + $0x38] sm:$0xff]
    %v525 = vld [vmem:[#allocation5 + $0x40] sm:$0xff]
    %v526 = vld [vmem:[#allocation5 + $0x48] sm:$0xff]
    %v527 = vld [vmem:[#allocation5 + $0x50] sm:$0xff]
    %v528 = vld [vmem:[#allocation5 + $0x58] sm:$0xff]
    %v529 = vld [vmem:[#allocation5 + $0x60] sm:$0xff]
    %v530 = vld [vmem:[#allocation5 + $0x68] sm:$0xff]
    %v531 = vld [vmem:[#allocation5 + $0x70] sm:$0xff]
    %v532 = vld [vmem:[#allocation5 + $0x78] sm:$0xff]
    %533 = vmatprep.subr.mxu0 0.0
    %534 = vmatpush1.msra.mxu0 %v517
    %535 = vmatprep.subr.mxu0 0.0
    %536 = vmatpush1.msra.mxu0 %v518
    %537 = vmatprep.subr.mxu0 0.0
    %538 = vmatpush1.msra.mxu0 %v519
    %539 = vmatprep.subr.mxu0 0.0
    %540 = vmatpush1.msra.mxu0 %v520
    %541 = vmatprep.subr.mxu0 0.0
    %542 = vmatpush1.msra.mxu0 %v521
    %543 = vmatprep.subr.mxu0 0.0
    %544 = vmatpush1.msra.mxu0 %v522
    %545 = vmatprep.subr.mxu0 0.0
    %546 = vmatpush1.msra.mxu0 %v523
    %547 = vmatprep.subr.mxu0 0.0
    %548 = vmatpush1.msra.mxu0 %v524
    %549 = vmatprep.subr.mxu0 0.0
    %550 = vmatpush1.msra.mxu0 %v525
    %551 = vmatprep.subr.mxu0 0.0
    %552 = vmatpush1.msra.mxu0 %v526
    %553 = vmatprep.subr.mxu0 0.0
    %554 = vmatpush1.msra.mxu0 %v527
    %555 = vmatprep.subr.mxu0 0.0
    %556 = vmatpush1.msra.mxu0 %v528
    %557 = vmatprep.subr.mxu0 0.0
    %558 = vmatpush1.msra.mxu0 %v529
    %559 = vmatprep.subr.mxu0 0.0
    %560 = vmatpush1.msra.mxu0 %v530
    %561 = vmatprep.subr.mxu0 0.0
    %562 = vmatpush1.msra.mxu0 %v531
    %563 = vmatprep.subr.mxu0 0.0
    %564 = vmatpush1.msra.mxu0 %v532
    %565 = vmatprep.subr.mxu0 0.0
    %566 = vmatpush1.msra.mxu0 0.0
    %567 = vmatprep.subr.mxu0 0.0
    %568 = vmatpush1.msra.mxu0 0.0
    %569 = vmatprep.subr.mxu0 0.0
    %570 = vmatpush1.msra.mxu0 0.0
    %571 = vmatprep.subr.mxu0 0.0
    %572 = vmatpush1.msra.mxu0 0.0
    %573 = vmatprep.subr.mxu0 0.0
    %574 = vmatpush1.msra.mxu0 0.0
    %575 = vmatprep.subr.mxu0 0.0
    %576 = vmatpush1.msra.mxu0 0.0
    %577 = vmatprep.subr.mxu0 0.0
    %578 = vmatpush1.msra.mxu0 0.0
    %579 = vmatprep.subr.mxu0 0.0
    %580 = vmatpush1.msra.mxu0 0.0
    %581 = vmatprep.subr.mxu0 0.0
    %582 = vmatpush1.msra.mxu0 0.0
    %583 = vmatprep.subr.mxu0 0.0
    %584 = vmatpush1.msra.mxu0 0.0
    %585 = vmatprep.subr.mxu0 0.0
    %586 = vmatpush1.msra.mxu0 0.0
    %587 = vmatprep.subr.mxu0 0.0
    %588 = vmatpush1.msra.mxu0 0.0
    %589 = vmatprep.subr.mxu0 0.0
    %590 = vmatpush1.msra.mxu0 0.0
    %591 = vmatprep.subr.mxu0 0.0
    %592 = vmatpush1.msra.mxu0 0.0
    %593 = vmatprep.subr.mxu0 0.0
    %594 = vmatpush1.msra.mxu0 0.0
    %595 = vmatprep.subr.mxu0 0.0
    %596 = vmatpush1.msra.mxu0 0.0
    %597 = vmatprep.mubr.f32.mxu0 0.0
    %598 = vmatmul.mubr.f32.gmra.mrb[0].mxu0 %v516
    %v599 = vpop.f32.mrb[0].mxu0
    %v600 = vadd.f32 0.0, %v599
    %v601 = vpop.f32.mrb[0].mxu0
    %602 = vdwg.mxu0
    %v603 = vadd.f32 %v296, %v600
    %vm604 = vcmp.gt.f32.partialorder %v603, 0.0
    %v605 = vmin.f32 %v603, 0.0
    %v606 = vmul.f32 %v605, 1.442695
    %v607 = vpow.pop %v606
    %v608 = vsub.f32 %v607, 1.0
    %v609 = vsel %vm604, %v603, %v608
    %v610 = vld [vmem:[%s4] sm:$0xff]
    %v611 = vld [vmem:[%s4 + $0x8] sm:$0xff]
    %v612 = vld [vmem:[%s4 + $0x10] sm:$0xff]
    %v613 = vld [vmem:[%s4 + $0x18] sm:$0xff]
    %v614 = vld [vmem:[%s4 + $0x20] sm:$0xff]
    %v615 = vld [vmem:[%s4 + $0x28] sm:$0xff]
    %v616 = vld [vmem:[%s4 + $0x30] sm:$0xff]
    %v617 = vld [vmem:[%s4 + $0x38] sm:$0xff]
    %v618 = vld [vmem:[%s4 + $0x40] sm:$0xff]
    %v619 = vld [vmem:[%s4 + $0x48] sm:$0xff]
    %v620 = vld [vmem:[%s4 + $0x50] sm:$0xff]
    %v621 = vld [vmem:[%s4 + $0x58] sm:$0xff]
    %v622 = vld [vmem:[%s4 + $0x60] sm:$0xff]
    %v623 = vld [vmem:[%s4 + $0x68] sm:$0xff]
    %v624 = vld [vmem:[%s4 + $0x70] sm:$0xff]
    %v625 = vld [vmem:[%s4 + $0x78] sm:$0xff]
    %626 = vmatprep.subr.mxu0 0.0
    %627 = vmatpush1.msra.mxu0 %v610
    %628 = vmatprep.subr.mxu0 0.0
    %629 = vmatpush1.msra.mxu0 %v611
    %630 = vmatprep.subr.mxu0 0.0
    %631 = vmatpush1.msra.mxu0 %v612
    %632 = vmatprep.subr.mxu0 0.0
    %633 = vmatpush1.msra.mxu0 %v613
    %634 = vmatprep.subr.mxu0 0.0
    %635 = vmatpush1.msra.mxu0 %v614
    %636 = vmatprep.subr.mxu0 0.0
    %637 = vmatpush1.msra.mxu0 %v615
    %638 = vmatprep.subr.mxu0 0.0
    %639 = vmatpush1.msra.mxu0 %v616
    %640 = vmatprep.subr.mxu0 0.0
    %641 = vmatpush1.msra.mxu0 %v617
    %642 = vmatprep.subr.mxu0 0.0
    %643 = vmatpush1.msra.mxu0 %v618
    %644 = vmatprep.subr.mxu0 0.0
    %645 = vmatpush1.msra.mxu0 %v619
    %646 = vmatprep.subr.mxu0 0.0
    %647 = vmatpush1.msra.mxu0 %v620
    %648 = vmatprep.subr.mxu0 0.0
    %649 = vmatpush1.msra.mxu0 %v621
    %650 = vmatprep.subr.mxu0 0.0
    %651 = vmatpush1.msra.mxu0 %v622
    %652 = vmatprep.subr.mxu0 0.0
    %653 = vmatpush1.msra.mxu0 %v623
    %654 = vmatprep.subr.mxu0 0.0
    %655 = vmatpush1.msra.mxu0 %v624
    %656 = vmatprep.subr.mxu0 0.0
    %657 = vmatpush1.msra.mxu0 %v625
    %658 = vmatprep.subr.mxu0 0.0
    %659 = vmatpush1.msra.mxu0 0.0
    %660 = vmatprep.subr.mxu0 0.0
    %661 = vmatpush1.msra.mxu0 0.0
    %662 = vmatprep.subr.mxu0 0.0
    %663 = vmatpush1.msra.mxu0 0.0
    %664 = vmatprep.subr.mxu0 0.0
    %665 = vmatpush1.msra.mxu0 0.0
    %666 = vmatprep.subr.mxu0 0.0
    %667 = vmatpush1.msra.mxu0 0.0
    %668 = vmatprep.subr.mxu0 0.0
    %669 = vmatpush1.msra.mxu0 0.0
    %670 = vmatprep.subr.mxu0 0.0
    %671 = vmatpush1.msra.mxu0 0.0
    %672 = vmatprep.subr.mxu0 0.0
    %673 = vmatpush1.msra.mxu0 0.0
    %674 = vmatprep.subr.mxu0 0.0
    %675 = vmatpush1.msra.mxu0 0.0
    %676 = vmatprep.subr.mxu0 0.0
    %677 = vmatpush1.msra.mxu0 0.0
    %678 = vmatprep.subr.mxu0 0.0
    %679 = vmatpush1.msra.mxu0 0.0
    %680 = vmatprep.subr.mxu0 0.0
    %681 = vmatpush1.msra.mxu0 0.0
    %682 = vmatprep.subr.mxu0 0.0
    %683 = vmatpush1.msra.mxu0 0.0
    %684 = vmatprep.subr.mxu0 0.0
    %685 = vmatpush1.msra.mxu0 0.0
    %686 = vmatprep.subr.mxu0 0.0
    %687 = vmatpush1.msra.mxu0 0.0
    %688 = vmatprep.subr.mxu0 0.0
    %689 = vmatpush1.msra.mxu0 0.0
    %690 = vmatprep.mubr.f32.mxu0 0.0
    %691 = vmatmul.mubr.f32.gmra.mrb[0].mxu0 %v609
    %v692 = vpop.f32.mrb[0].mxu0
    %v693 = vadd.f32 0.0, %v692
    %v694 = vpop.f32.mrb[0].mxu0
    %695 = vdwg.mxu0
    %v696 = vadd.f32 %v509, %v693
    %v697 = vmul.f32 %v696, 0.5
    %v698 = vmul.f32 %v697, 1.442695
    %v699 = vpow.pop %v698
    %701 = vrot.lane.b32.xlu0 %v699, 40
    %v702 = vpop.permute.xlu0 %701
    %v704 = vmul.f32 %v98, %v702
    %706 = vrot.lane.b32.xlu0 %v704, 80
    %v707 = vpop.permute.xlu0 %706
    %v709 = vadd.f32 %v696, %v707
    %v710 = vld [vmem:[#allocation2] sm:$0xff]
    %v711 = vld [vmem:[#allocation2 + $0x8] sm:$0xff]
    %v712 = vld [vmem:[#allocation2 + $0x10] sm:$0xff]
    %v713 = vld [vmem:[#allocation2 + $0x18] sm:$0xff]
    %v714 = vld [vmem:[#allocation2 + $0x20] sm:$0xff]
    %v715 = vld [vmem:[#allocation2 + $0x28] sm:$0xff]
    %v716 = vld [vmem:[#allocation2 + $0x30] sm:$0xff]
    %v717 = vld [vmem:[#allocation2 + $0x38] sm:$0xff]
    %v718 = vld [vmem:[#allocation2 + $0x40] sm:$0xff]
    %v719 = vld [vmem:[#allocation2 + $0x48] sm:$0xff]
    %v720 = vld [vmem:[#allocation2 + $0x50] sm:$0xff]
    %v721 = vld [vmem:[#allocation2 + $0x58] sm:$0xff]
    %vm722 = vcmask 64512
    %v724 = vsel %vm722, %v709, 0
    %726 = vmatprep.subr.mxu0 %v711
    %727 = vmatpush1.msra.mxu0 %v710
    %728 = vmatprep.subr.mxu0 0.0
    %729 = vmatpush1.msra.mxu0 0.0
    %730 = vmatprep.subr.mxu0 0.0
    %731 = vmatpush1.msra.mxu0 0.0
    %732 = vmatprep.subr.mxu0 0.0
    %733 = vmatpush1.msra.mxu0 0.0
    %734 = vmatprep.subr.mxu0 0.0
    %735 = vmatpush1.msra.mxu0 0.0
    %736 = vmatprep.subr.mxu0 0.0
    %737 = vmatpush1.msra.mxu0 0.0
    %738 = vmatprep.subr.mxu0 0.0
    %739 = vmatpush1.msra.mxu0 0.0
    %740 = vmatprep.subr.mxu0 0.0
    %741 = vmatpush1.msra.mxu0 0.0
    %742 = vmatprep.subr.mxu0 0.0
    %743 = vmatpush1.msra.mxu0 0.0
    %744 = vmatprep.subr.mxu0 0.0
    %745 = vmatpush1.msra.mxu0 0.0
    %746 = vmatprep.subr.mxu0 0.0
    %747 = vmatpush1.msra.mxu0 0.0
    %748 = vmatprep.subr.mxu0 0.0
    %749 = vmatpush1.msra.mxu0 0.0
    %750 = vmatprep.subr.mxu0 0.0
    %751 = vmatpush1.msra.mxu0 0.0
    %752 = vmatprep.subr.mxu0 0.0
    %753 = vmatpush1.msra.mxu0 0.0
    %754 = vmatprep.subr.mxu0 0.0
    %755 = vmatpush1.msra.mxu0 0.0
    %756 = vmatprep.subr.mxu0 0.0
    %757 = vmatpush1.msra.mxu0 0.0
    %758 = vmatprep.subr.mxu0 0.0
    %759 = vmatpush1.msra.mxu0 0.0
    %760 = vmatprep.subr.mxu0 0.0
    %761 = vmatpush1.msra.mxu0 0.0
    %762 = vmatprep.subr.mxu0 0.0
    %763 = vmatpush1.msra.mxu0 0.0
    %764 = vmatprep.subr.mxu0 0.0
    %765 = vmatpush1.msra.mxu0 0.0
    %766 = vmatprep.subr.mxu0 0.0
    %767 = vmatpush1.msra.mxu0 0.0
    %768 = vmatprep.subr.mxu0 0.0
    %769 = vmatpush1.msra.mxu0 0.0
    %770 = vmatprep.subr.mxu0 0.0
    %771 = vmatpush1.msra.mxu0 0.0
    %772 = vmatprep.subr.mxu0 0.0
    %773 = vmatpush1.msra.mxu0 0.0
    %774 = vmatprep.subr.mxu0 0.0
    %775 = vmatpush1.msra.mxu0 0.0
    %776 = vmatprep.subr.mxu0 0.0
    %777 = vmatpush1.msra.mxu0 0.0
    %778 = vmatprep.subr.mxu0 0.0
    %779 = vmatpush1.msra.mxu0 0.0
    %780 = vmatprep.subr.mxu0 0.0
    %781 = vmatpush1.msra.mxu0 0.0
    %782 = vmatprep.subr.mxu0 0.0
    %783 = vmatpush1.msra.mxu0 0.0
    %784 = vmatprep.subr.mxu0 0.0
    %785 = vmatpush1.msra.mxu0 0.0
    %786 = vmatprep.subr.mxu0 0.0
    %787 = vmatpush1.msra.mxu0 0.0
    %788 = vmatprep.subr.mxu0 0.0
    %789 = vmatpush1.msra.mxu0 0.0
    %790 = vmatprep.mubr.f32.mxu0 0.0
    %791 = vmatmul.mubr.f32.gmra.mrb[0].mxu0 %v724
    %v792 = vpop.f32.mrb[0].mxu0
    %v793 = vadd.f32 0.0, %v792
    %v794 = vpop.f32.mrb[0].mxu0
    %v795 = vadd.f32 0.0, %v794
    %796 = vdwg.mxu0
    %797 = vmatprep.subr.mxu0 %v713
    %798 = vmatpush1.msra.mxu0 %v712
    %799 = vmatprep.subr.mxu0 0.0
    %800 = vmatpush1.msra.mxu0 0.0
    %801 = vmatprep.subr.mxu0 0.0
    %802 = vmatpush1.msra.mxu0 0.0
    %803 = vmatprep.subr.mxu0 0.0
    %804 = vmatpush1.msra.mxu0 0.0
    %805 = vmatprep.subr.mxu0 0.0
    %806 = vmatpush1.msra.mxu0 0.0
    %807 = vmatprep.subr.mxu0 0.0
    %808 = vmatpush1.msra.mxu0 0.0
    %809 = vmatprep.subr.mxu0 0.0
    %810 = vmatpush1.msra.mxu0 0.0
    %811 = vmatprep.subr.mxu0 0.0
    %812 = vmatpush1.msra.mxu0 0.0
    %813 = vmatprep.subr.mxu0 0.0
    %814 = vmatpush1.msra.mxu0 0.0
    %815 = vmatprep.subr.mxu0 0.0
    %816 = vmatpush1.msra.mxu0 0.0
    %817 = vmatprep.subr.mxu0 0.0
    %818 = vmatpush1.msra.mxu0 0.0
    %819 = vmatprep.subr.mxu0 0.0
    %820 = vmatpush1.msra.mxu0 0.0
    %821 = vmatprep.subr.mxu0 0.0
    %822 = vmatpush1.msra.mxu0 0.0
    %823 = vmatprep.subr.mxu0 0.0
    %824 = vmatpush1.msra.mxu0 0.0
    %825 = vmatprep.subr.mxu0 0.0
    %826 = vmatpush1.msra.mxu0 0.0
    %827 = vmatprep.subr.mxu0 0.0
    %828 = vmatpush1.msra.mxu0 0.0
    %829 = vmatprep.subr.mxu0 0.0
    %830 = vmatpush1.msra.mxu0 0.0
    %831 = vmatprep.subr.mxu0 0.0
    %832 = vmatpush1.msra.mxu0 0.0
    %833 = vmatprep.subr.mxu0 0.0
    %834 = vmatpush1.msra.mxu0 0.0
    %835 = vmatprep.subr.mxu0 0.0
    %836 = vmatpush1.msra.mxu0 0.0
    %837 = vmatprep.subr.mxu0 0.0
    %838 = vmatpush1.msra.mxu0 0.0
    %839 = vmatprep.subr.mxu0 0.0
    %840 = vmatpush1.msra.mxu0 0.0
    %841 = vmatprep.subr.mxu0 0.0
    %842 = vmatpush1.msra.mxu0 0.0
    %843 = vmatprep.subr.mxu0 0.0
    %844 = vmatpush1.msra.mxu0 0.0
    %845 = vmatprep.subr.mxu0 0.0
    %846 = vmatpush1.msra.mxu0 0.0
    %847 = vmatprep.subr.mxu0 0.0
    %848 = vmatpush1.msra.mxu0 0.0
    %849 = vmatprep.subr.mxu0 0.0
    %850 = vmatpush1.msra.mxu0 0.0
    %851 = vmatprep.subr.mxu0 0.0
    %852 = vmatpush1.msra.mxu0 0.0
    %853 = vmatprep.subr.mxu0 0.0
    %854 = vmatpush1.msra.mxu0 0.0
    %855 = vmatprep.subr.mxu0 0.0
    %856 = vmatpush1.msra.mxu0 0.0
    %857 = vmatprep.subr.mxu0 0.0
    %858 = vmatpush1.msra.mxu0 0.0
    %859 = vmatprep.subr.mxu0 0.0
    %860 = vmatpush1.msra.mxu0 0.0
    %861 = vmatprep.mubr.f32.mxu0 0.0
    %862 = vmatmul.mubr.f32.gmra.mrb[0].mxu0 %v724
    %v863 = vpop.f32.mrb[0].mxu0
    %v864 = vadd.f32 0.0, %v863
    %v865 = vpop.f32.mrb[0].mxu0
    %v866 = vadd.f32 0.0, %v865
    %867 = vdwg.mxu0
    %868 = vmatprep.subr.mxu0 %v715
    %869 = vmatpush1.msra.mxu0 %v714
    %870 = vmatprep.subr.mxu0 0.0
    %871 = vmatpush1.msra.mxu0 0.0
    %872 = vmatprep.subr.mxu0 0.0
    %873 = vmatpush1.msra.mxu0 0.0
    %874 = vmatprep.subr.mxu0 0.0
    %875 = vmatpush1.msra.mxu0 0.0
    %876 = vmatprep.subr.mxu0 0.0
    %877 = vmatpush1.msra.mxu0 0.0
    %878 = vmatprep.subr.mxu0 0.0
    %879 = vmatpush1.msra.mxu0 0.0
    %880 = vmatprep.subr.mxu0 0.0
    %881 = vmatpush1.msra.mxu0 0.0
    %882 = vmatprep.subr.mxu0 0.0
    %883 = vmatpush1.msra.mxu0 0.0
    %884 = vmatprep.subr.mxu0 0.0
    %885 = vmatpush1.msra.mxu0 0.0
    %886 = vmatprep.subr.mxu0 0.0
    %887 = vmatpush1.msra.mxu0 0.0
    %888 = vmatprep.subr.mxu0 0.0
    %889 = vmatpush1.msra.mxu0 0.0
    %890 = vmatprep.subr.mxu0 0.0
    %891 = vmatpush1.msra.mxu0 0.0
    %892 = vmatprep.subr.mxu0 0.0
    %893 = vmatpush1.msra.mxu0 0.0
    %894 = vmatprep.subr.mxu0 0.0
    %895 = vmatpush1.msra.mxu0 0.0
    %896 = vmatprep.subr.mxu0 0.0
    %897 = vmatpush1.msra.mxu0 0.0
    %898 = vmatprep.subr.mxu0 0.0
    %899 = vmatpush1.msra.mxu0 0.0
    %900 = vmatprep.subr.mxu0 0.0
    %901 = vmatpush1.msra.mxu0 0.0
    %902 = vmatprep.subr.mxu0 0.0
    %903 = vmatpush1.msra.mxu0 0.0
    %904 = vmatprep.subr.mxu0 0.0
    %905 = vmatpush1.msra.mxu0 0.0
    %906 = vmatprep.subr.mxu0 0.0
    %907 = vmatpush1.msra.mxu0 0.0
    %908 = vmatprep.subr.mxu0 0.0
    %909 = vmatpush1.msra.mxu0 0.0
    %910 = vmatprep.subr.mxu0 0.0
    %911 = vmatpush1.msra.mxu0 0.0
    %912 = vmatprep.subr.mxu0 0.0
    %913 = vmatpush1.msra.mxu0 0.0
    %914 = vmatprep.subr.mxu0 0.0
    %915 = vmatpush1.msra.mxu0 0.0
    %916 = vmatprep.subr.mxu0 0.0
    %917 = vmatpush1.msra.mxu0 0.0
    %918 = vmatprep.subr.mxu0 0.0
    %919 = vmatpush1.msra.mxu0 0.0
    %920 = vmatprep.subr.mxu0 0.0
    %921 = vmatpush1.msra.mxu0 0.0
    %922 = vmatprep.subr.mxu0 0.0
    %923 = vmatpush1.msra.mxu0 0.0
    %924 = vmatprep.subr.mxu0 0.0
    %925 = vmatpush1.msra.mxu0 0.0
    %926 = vmatprep.subr.mxu0 0.0
    %927 = vmatpush1.msra.mxu0 0.0
    %928 = vmatprep.subr.mxu0 0.0
    %929 = vmatpush1.msra.mxu0 0.0
    %930 = vmatprep.subr.mxu0 0.0
    %931 = vmatpush1.msra.mxu0 0.0
    %932 = vmatprep.mubr.f32.mxu0 0.0
    %933 = vmatmul.mubr.f32.gmra.mrb[0].mxu0 %v724
    %v934 = vpop.f32.mrb[0].mxu0
    %v935 = vadd.f32 0.0, %v934
    %v936 = vpop.f32.mrb[0].mxu0
    %v937 = vadd.f32 0.0, %v936
    %938 = vdwg.mxu0
    %939 = vmatprep.subr.mxu0 %v717
    %940 = vmatpush1.msra.mxu0 %v716
    %941 = vmatprep.subr.mxu0 0.0
    %942 = vmatpush1.msra.mxu0 0.0
    %943 = vmatprep.subr.mxu0 0.0
    %944 = vmatpush1.msra.mxu0 0.0
    %945 = vmatprep.subr.mxu0 0.0
    %946 = vmatpush1.msra.mxu0 0.0
    %947 = vmatprep.subr.mxu0 0.0
    %948 = vmatpush1.msra.mxu0 0.0
    %949 = vmatprep.subr.mxu0 0.0
    %950 = vmatpush1.msra.mxu0 0.0
    %951 = vmatprep.subr.mxu0 0.0
    %952 = vmatpush1.msra.mxu0 0.0
    %953 = vmatprep.subr.mxu0 0.0
    %954 = vmatpush1.msra.mxu0 0.0
    %955 = vmatprep.subr.mxu0 0.0
    %956 = vmatpush1.msra.mxu0 0.0
    %957 = vmatprep.subr.mxu0 0.0
    %958 = vmatpush1.msra.mxu0 0.0
    %959 = vmatprep.subr.mxu0 0.0
    %960 = vmatpush1.msra.mxu0 0.0
    %961 = vmatprep.subr.mxu0 0.0
    %962 = vmatpush1.msra.mxu0 0.0
    %963 = vmatprep.subr.mxu0 0.0
    %964 = vmatpush1.msra.mxu0 0.0
    %965 = vmatprep.subr.mxu0 0.0
    %966 = vmatpush1.msra.mxu0 0.0
    %967 = vmatprep.subr.mxu0 0.0
    %968 = vmatpush1.msra.mxu0 0.0
    %969 = vmatprep.subr.mxu0 0.0
    %970 = vmatpush1.msra.mxu0 0.0
    %971 = vmatprep.subr.mxu0 0.0
    %972 = vmatpush1.msra.mxu0 0.0
    %973 = vmatprep.subr.mxu0 0.0
    %974 = vmatpush1.msra.mxu0 0.0
    %975 = vmatprep.subr.mxu0 0.0
    %976 = vmatpush1.msra.mxu0 0.0
    %977 = vmatprep.subr.mxu0 0.0
    %978 = vmatpush1.msra.mxu0 0.0
    %979 = vmatprep.subr.mxu0 0.0
    %980 = vmatpush1.msra.mxu0 0.0
    %981 = vmatprep.subr.mxu0 0.0
    %982 = vmatpush1.msra.mxu0 0.0
    %983 = vmatprep.subr.mxu0 0.0
    %984 = vmatpush1.msra.mxu0 0.0
    %985 = vmatprep.subr.mxu0 0.0
    %986 = vmatpush1.msra.mxu0 0.0
    %987 = vmatprep.subr.mxu0 0.0
    %988 = vmatpush1.msra.mxu0 0.0
    %989 = vmatprep.subr.mxu0 0.0
    %990 = vmatpush1.msra.mxu0 0.0
    %991 = vmatprep.subr.mxu0 0.0
    %992 = vmatpush1.msra.mxu0 0.0
    %993 = vmatprep.subr.mxu0 0.0
    %994 = vmatpush1.msra.mxu0 0.0
    %995 = vmatprep.subr.mxu0 0.0
    %996 = vmatpush1.msra.mxu0 0.0
    %997 = vmatprep.subr.mxu0 0.0
    %998 = vmatpush1.msra.mxu0 0.0
    %999 = vmatprep.subr.mxu0 0.0
    %1000 = vmatpush1.msra.mxu0 0.0
    %1001 = vmatprep.subr.mxu0 0.0
    %1002 = vmatpush1.msra.mxu0 0.0
    %1003 = vmatprep.mubr.f32.mxu0 0.0
    %1004 = vmatmul.mubr.f32.gmra.mrb[0].mxu0 %v724
    %v1005 = vpop.f32.mrb[0].mxu0
    %v1006 = vadd.f32 0.0, %v1005
    %v1007 = vpop.f32.mrb[0].mxu0
    %v1008 = vadd.f32 0.0, %v1007
    %1009 = vdwg.mxu0
    %1010 = vmatprep.subr.mxu0 %v719
    %1011 = vmatpush1.msra.mxu0 %v718
    %1012 = vmatprep.subr.mxu0 0.0
    %1013 = vmatpush1.msra.mxu0 0.0
    %1014 = vmatprep.subr.mxu0 0.0
    %1015 = vmatpush1.msra.mxu0 0.0
    %1016 = vmatprep.subr.mxu0 0.0
    %1017 = vmatpush1.msra.mxu0 0.0
    %1018 = vmatprep.subr.mxu0 0.0
    %1019 = vmatpush1.msra.mxu0 0.0
    %1020 = vmatprep.subr.mxu0 0.0
    %1021 = vmatpush1.msra.mxu0 0.0
    %1022 = vmatprep.subr.mxu0 0.0
    %1023 = vmatpush1.msra.mxu0 0.0
    %1024 = vmatprep.subr.mxu0 0.0
    %1025 = vmatpush1.msra.mxu0 0.0
    %1026 = vmatprep.subr.mxu0 0.0
    %1027 = vmatpush1.msra.mxu0 0.0
    %1028 = vmatprep.subr.mxu0 0.0
    %1029 = vmatpush1.msra.mxu0 0.0
    %1030 = vmatprep.subr.mxu0 0.0
    %1031 = vmatpush1.msra.mxu0 0.0
    %1032 = vmatprep.subr.mxu0 0.0
    %1033 = vmatpush1.msra.mxu0 0.0
    %1034 = vmatprep.subr.mxu0 0.0
    %1035 = vmatpush1.msra.mxu0 0.0
    %1036 = vmatprep.subr.mxu0 0.0
    %1037 = vmatpush1.msra.mxu0 0.0
    %1038 = vmatprep.subr.mxu0 0.0
    %1039 = vmatpush1.msra.mxu0 0.0
    %1040 = vmatprep.subr.mxu0 0.0
    %1041 = vmatpush1.msra.mxu0 0.0
    %1042 = vmatprep.subr.mxu0 0.0
    %1043 = vmatpush1.msra.mxu0 0.0
    %1044 = vmatprep.subr.mxu0 0.0
    %1045 = vmatpush1.msra.mxu0 0.0
    %1046 = vmatprep.subr.mxu0 0.0
    %1047 = vmatpush1.msra.mxu0 0.0
    %1048 = vmatprep.subr.mxu0 0.0
    %1049 = vmatpush1.msra.mxu0 0.0
    %1050 = vmatprep.subr.mxu0 0.0
    %1051 = vmatpush1.msra.mxu0 0.0
    %1052 = vmatprep.subr.mxu0 0.0
    %1053 = vmatpush1.msra.mxu0 0.0
    %1054 = vmatprep.subr.mxu0 0.0
    %1055 = vmatpush1.msra.mxu0 0.0
    %1056 = vmatprep.subr.mxu0 0.0
    %1057 = vmatpush1.msra.mxu0 0.0
    %1058 = vmatprep.subr.mxu0 0.0
    %1059 = vmatpush1.msra.mxu0 0.0
    %1060 = vmatprep.subr.mxu0 0.0
    %1061 = vmatpush1.msra.mxu0 0.0
    %1062 = vmatprep.subr.mxu0 0.0
    %1063 = vmatpush1.msra.mxu0 0.0
    %1064 = vmatprep.subr.mxu0 0.0
    %1065 = vmatpush1.msra.mxu0 0.0
    %1066 = vmatprep.subr.mxu0 0.0
    %1067 = vmatpush1.msra.mxu0 0.0
    %1068 = vmatprep.subr.mxu0 0.0
    %1069 = vmatpush1.msra.mxu0 0.0
    %1070 = vmatprep.subr.mxu0 0.0
    %1071 = vmatpush1.msra.mxu0 0.0
    %1072 = vmatprep.subr.mxu0 0.0
    %1073 = vmatpush1.msra.mxu0 0.0
    %1074 = vmatprep.mubr.f32.mxu0 0.0
    %1075 = vmatmul.mubr.f32.gmra.mrb[0].mxu0 %v724
    %v1076 = vpop.f32.mrb[0].mxu0
    %v1077 = vadd.f32 0.0, %v1076
    %v1078 = vpop.f32.mrb[0].mxu0
    %v1079 = vadd.f32 0.0, %v1078
    %1080 = vdwg.mxu0
    %1081 = vmatprep.subr.mxu0 %v721
    %1082 = vmatpush1.msra.mxu0 %v720
    %1083 = vmatprep.subr.mxu0 0.0
    %1084 = vmatpush1.msra.mxu0 0.0
    %1085 = vmatprep.subr.mxu0 0.0
    %1086 = vmatpush1.msra.mxu0 0.0
    %1087 = vmatprep.subr.mxu0 0.0
    %1088 = vmatpush1.msra.mxu0 0.0
    %1089 = vmatprep.subr.mxu0 0.0
    %1090 = vmatpush1.msra.mxu0 0.0
    %1091 = vmatprep.subr.mxu0 0.0
    %1092 = vmatpush1.msra.mxu0 0.0
    %1093 = vmatprep.subr.mxu0 0.0
    %1094 = vmatpush1.msra.mxu0 0.0
    %1095 = vmatprep.subr.mxu0 0.0
    %1096 = vmatpush1.msra.mxu0 0.0
    %1097 = vmatprep.subr.mxu0 0.0
    %1098 = vmatpush1.msra.mxu0 0.0
    %1099 = vmatprep.subr.mxu0 0.0
    %1100 = vmatpush1.msra.mxu0 0.0
    %1101 = vmatprep.subr.mxu0 0.0
    %1102 = vmatpush1.msra.mxu0 0.0
    %1103 = vmatprep.subr.mxu0 0.0
    %1104 = vmatpush1.msra.mxu0 0.0
    %1105 = vmatprep.subr.mxu0 0.0
    %1106 = vmatpush1.msra.mxu0 0.0
    %1107 = vmatprep.subr.mxu0 0.0
    %1108 = vmatpush1.msra.mxu0 0.0
    %1109 = vmatprep.subr.mxu0 0.0
    %1110 = vmatpush1.msra.mxu0 0.0
    %1111 = vmatprep.subr.mxu0 0.0
    %1112 = vmatpush1.msra.mxu0 0.0
    %1113 = vmatprep.subr.mxu0 0.0
    %1114 = vmatpush1.msra.mxu0 0.0
    %1115 = vmatprep.subr.mxu0 0.0
    %1116 = vmatpush1.msra.mxu0 0.0
    %1117 = vmatprep.subr.mxu0 0.0
    %1118 = vmatpush1.msra.mxu0 0.0
    %1119 = vmatprep.subr.mxu0 0.0
    %1120 = vmatpush1.msra.mxu0 0.0
    %1121 = vmatprep.subr.mxu0 0.0
    %1122 = vmatpush1.msra.mxu0 0.0
    %1123 = vmatprep.subr.mxu0 0.0
    %1124 = vmatpush1.msra.mxu0 0.0
    %1125 = vmatprep.subr.mxu0 0.0
    %1126 = vmatpush1.msra.mxu0 0.0
    %1127 = vmatprep.subr.mxu0 0.0
    %1128 = vmatpush1.msra.mxu0 0.0
    %1129 = vmatprep.subr.mxu0 0.0
    %1130 = vmatpush1.msra.mxu0 0.0
    %1131 = vmatprep.subr.mxu0 0.0
    %1132 = vmatpush1.msra.mxu0 0.0
    %1133 = vmatprep.subr.mxu0 0.0
    %1134 = vmatpush1.msra.mxu0 0.0
    %1135 = vmatprep.subr.mxu0 0.0
    %1136 = vmatpush1.msra.mxu0 0.0
    %1137 = vmatprep.subr.mxu0 0.0
    %1138 = vmatpush1.msra.mxu0 0.0
    %1139 = vmatprep.subr.mxu0 0.0
    %1140 = vmatpush1.msra.mxu0 0.0
    %1141 = vmatprep.subr.mxu0 0.0
    %1142 = vmatpush1.msra.mxu0 0.0
    %1143 = vmatprep.subr.mxu0 0.0
    %1144 = vmatpush1.msra.mxu0 0.0
    %1145 = vmatprep.mubr.f32.mxu0 0.0
    %1146 = vmatmul.mubr.f32.gmra.mrb[0].mxu0 %v724
    %v1147 = vpop.f32.mrb[0].mxu0
    %v1148 = vadd.f32 0.0, %v1147
    %v1149 = vpop.f32.mrb[0].mxu0
    %v1150 = vadd.f32 0.0, %v1149
    %1151 = vdwg.mxu0
    %v1152 = vadd.f32 %v365, %v793
    %vm1153 = vcmp.gt.f32.partialorder %v1152, 0.0
    %v1154 = vmin.f32 %v1152, 0.0
    %v1155 = vmul.f32 %v1154, 1.442695
    %v1156 = vpow.pop %v1155
    %v1157 = vsub.f32 %v1156, 1.0
    %v1158 = vsel %vm1153, %v1152, %v1157
    %v1159 = vld [vmem:[#allocation7] sm:$0xff]
    %v1160 = vld [vmem:[#allocation7 + $0x8] sm:$0xff]
    %v1161 = vld [vmem:[#allocation7 + $0x10] sm:$0xff]
    %v1162 = vld [vmem:[#allocation7 + $0x18] sm:$0xff]
    %v1163 = vld [vmem:[#allocation7 + $0x20] sm:$0xff]
    %v1164 = vld [vmem:[#allocation7 + $0x28] sm:$0xff]
    %v1165 = vld [vmem:[#allocation7 + $0x30] sm:$0xff]
    %v1166 = vld [vmem:[#allocation7 + $0x38] sm:$0xff]
    %v1167 = vld [vmem:[#allocation7 + $0x40] sm:$0xff]
    %v1168 = vld [vmem:[#allocation7 + $0x48] sm:$0xff]
    %v1169 = vld [vmem:[#allocation7 + $0x50] sm:$0xff]
    %v1170 = vld [vmem:[#allocation7 + $0x58] sm:$0xff]
    %v1171 = vld [vmem:[#allocation7 + $0x60] sm:$0xff]
    %v1172 = vld [vmem:[#allocation7 + $0x68] sm:$0xff]
    %v1173 = vld [vmem:[#allocation7 + $0x70] sm:$0xff]
    %v1174 = vld [vmem:[#allocation7 + $0x78] sm:$0xff]
    %1175 = vmatprep.subr.mxu0 0.0
    %1176 = vmatpush1.msra.mxu0 %v1159
    %1177 = vmatprep.subr.mxu0 0.0
    %1178 = vmatpush1.msra.mxu0 %v1160
    %1179 = vmatprep.subr.mxu0 0.0
    %1180 = vmatpush1.msra.mxu0 %v1161
    %1181 = vmatprep.subr.mxu0 0.0
    %1182 = vmatpush1.msra.mxu0 %v1162
    %1183 = vmatprep.subr.mxu0 0.0
    %1184 = vmatpush1.msra.mxu0 %v1163
    %1185 = vmatprep.subr.mxu0 0.0
    %1186 = vmatpush1.msra.mxu0 %v1164
    %1187 = vmatprep.subr.mxu0 0.0
    %1188 = vmatpush1.msra.mxu0 %v1165
    %1189 = vmatprep.subr.mxu0 0.0
    %1190 = vmatpush1.msra.mxu0 %v1166
    %1191 = vmatprep.subr.mxu0 0.0
    %1192 = vmatpush1.msra.mxu0 %v1167
    %1193 = vmatprep.subr.mxu0 0.0
    %1194 = vmatpush1.msra.mxu0 %v1168
    %1195 = vmatprep.subr.mxu0 0.0
    %1196 = vmatpush1.msra.mxu0 %v1169
    %1197 = vmatprep.subr.mxu0 0.0
    %1198 = vmatpush1.msra.mxu0 %v1170
    %1199 = vmatprep.subr.mxu0 0.0
    %1200 = vmatpush1.msra.mxu0 %v1171
    %1201 = vmatprep.subr.mxu0 0.0
    %1202 = vmatpush1.msra.mxu0 %v1172
    %1203 = vmatprep.subr.mxu0 0.0
    %1204 = vmatpush1.msra.mxu0 %v1173
    %1205 = vmatprep.subr.mxu0 0.0
    %1206 = vmatpush1.msra.mxu0 %v1174
    %1207 = vmatprep.subr.mxu0 0.0
    %1208 = vmatpush1.msra.mxu0 0.0
    %1209 = vmatprep.subr.mxu0 0.0
    %1210 = vmatpush1.msra.mxu0 0.0
    %1211 = vmatprep.subr.mxu0 0.0
    %1212 = vmatpush1.msra.mxu0 0.0
    %1213 = vmatprep.subr.mxu0 0.0
    %1214 = vmatpush1.msra.mxu0 0.0
    %1215 = vmatprep.subr.mxu0 0.0
    %1216 = vmatpush1.msra.mxu0 0.0
    %1217 = vmatprep.subr.mxu0 0.0
    %1218 = vmatpush1.msra.mxu0 0.0
    %1219 = vmatprep.subr.mxu0 0.0
    %1220 = vmatpush1.msra.mxu0 0.0
    %1221 = vmatprep.subr.mxu0 0.0
    %1222 = vmatpush1.msra.mxu0 0.0
    %1223 = vmatprep.subr.mxu0 0.0
    %1224 = vmatpush1.msra.mxu0 0.0
    %1225 = vmatprep.subr.mxu0 0.0
    %1226 = vmatpush1.msra.mxu0 0.0
    %1227 = vmatprep.subr.mxu0 0.0
    %1228 = vmatpush1.msra.mxu0 0.0
    %1229 = vmatprep.subr.mxu0 0.0
    %1230 = vmatpush1.msra.mxu0 0.0
    %1231 = vmatprep.subr.mxu0 0.0
    %1232 = vmatpush1.msra.mxu0 0.0
    %1233 = vmatprep.subr.mxu0 0.0
    %1234 = vmatpush1.msra.mxu0 0.0
    %1235 = vmatprep.subr.mxu0 0.0
    %1236 = vmatpush1.msra.mxu0 0.0
    %1237 = vmatprep.subr.mxu0 0.0
    %1238 = vmatpush1.msra.mxu0 0.0
    %1239 = vmatprep.mubr.f32.mxu0 0.0
    %1240 = vmatmul.mubr.f32.gmra.mrb[0].mxu0 %v1158
    %v1241 = vpop.f32.mrb[0].mxu0
    %v1242 = vadd.f32 0.0, %v1241
    %v1243 = vpop.f32.mrb[0].mxu0
    %1244 = vdwg.mxu0
    %v1245 = vadd.f32 %v795, %v1242
    %v1246 = vld [vmem:[%s6] sm:$0x1]
    %v1248 = vlaneseq
    %v1249 = vshrl.u32 %v1248, 7
    %v1250 = vsub.s32 0, %v1249
    %v1251 = vrot.slane %v1246, %v1250
    %v1253 = vadd.f32 %v1245, %v1251
    %vm1254 = vcmp.gt.f32.partialorder %v1253, 0.0
    %v1255 = vmin.f32 %v1253, 0.0
    %v1256 = vmul.f32 %v1255, 1.442695
    %v1257 = vpow.pop %v1256
    %v1258 = vsub.f32 %v1257, 1.0
    %v1259 = vsel %vm1254, %v1253, %v1258
    %v1260 = vld [vmem:[%s7] sm:$0xff]
    %v1261 = vld [vmem:[%s7 + $0x8] sm:$0xff]
    %v1262 = vld [vmem:[%s7 + $0x10] sm:$0xff]
    %v1263 = vld [vmem:[%s7 + $0x18] sm:$0xff]
    %v1264 = vld [vmem:[%s7 + $0x20] sm:$0xff]
    %v1265 = vld [vmem:[%s7 + $0x28] sm:$0xff]
    %v1266 = vld [vmem:[%s7 + $0x30] sm:$0xff]
    %v1267 = vld [vmem:[%s7 + $0x38] sm:$0xff]
    %v1268 = vld [vmem:[%s7 + $0x40] sm:$0xff]
    %v1269 = vld [vmem:[%s7 + $0x48] sm:$0xff]
    %v1270 = vld [vmem:[%s7 + $0x50] sm:$0xff]
    %v1271 = vld [vmem:[%s7 + $0x58] sm:$0xff]
    %v1272 = vld [vmem:[%s7 + $0x60] sm:$0xff]
    %v1273 = vld [vmem:[%s7 + $0x68] sm:$0xff]
    %v1274 = vld [vmem:[%s7 + $0x70] sm:$0xff]
    %v1275 = vld [vmem:[%s7 + $0x78] sm:$0xff]
    %1276 = vmatprep.subr.mxu0 0.0
    %1277 = vmatpush1.msra.mxu0 %v1260
    %1278 = vmatprep.subr.mxu0 0.0
    %1279 = vmatpush1.msra.mxu0 %v1261
    %1280 = vmatprep.subr.mxu0 0.0
    %1281 = vmatpush1.msra.mxu0 %v1262
    %1282 = vmatprep.subr.mxu0 0.0
    %1283 = vmatpush1.msra.mxu0 %v1263
    %1284 = vmatprep.subr.mxu0 0.0
    %1285 = vmatpush1.msra.mxu0 %v1264
    %1286 = vmatprep.subr.mxu0 0.0
    %1287 = vmatpush1.msra.mxu0 %v1265
    %1288 = vmatprep.subr.mxu0 0.0
    %1289 = vmatpush1.msra.mxu0 %v1266
    %1290 = vmatprep.subr.mxu0 0.0
    %1291 = vmatpush1.msra.mxu0 %v1267
    %1292 = vmatprep.subr.mxu0 0.0
    %1293 = vmatpush1.msra.mxu0 %v1268
    %1294 = vmatprep.subr.mxu0 0.0
    %1295 = vmatpush1.msra.mxu0 %v1269
    %1296 = vmatprep.subr.mxu0 0.0
    %1297 = vmatpush1.msra.mxu0 %v1270
    %1298 = vmatprep.subr.mxu0 0.0
    %1299 = vmatpush1.msra.mxu0 %v1271
    %1300 = vmatprep.subr.mxu0 0.0
    %1301 = vmatpush1.msra.mxu0 %v1272
    %1302 = vmatprep.subr.mxu0 0.0
    %1303 = vmatpush1.msra.mxu0 %v1273
    %1304 = vmatprep.subr.mxu0 0.0
    %1305 = vmatpush1.msra.mxu0 %v1274
    %1306 = vmatprep.subr.mxu0 0.0
    %1307 = vmatpush1.msra.mxu0 %v1275
    %1308 = vmatprep.subr.mxu0 0.0
    %1309 = vmatpush1.msra.mxu0 0.0
    %1310 = vmatprep.subr.mxu0 0.0
    %1311 = vmatpush1.msra.mxu0 0.0
    %1312 = vmatprep.subr.mxu0 0.0
    %1313 = vmatpush1.msra.mxu0 0.0
    %1314 = vmatprep.subr.mxu0 0.0
    %1315 = vmatpush1.msra.mxu0 0.0
    %1316 = vmatprep.subr.mxu0 0.0
    %1317 = vmatpush1.msra.mxu0 0.0
    %1318 = vmatprep.subr.mxu0 0.0
    %1319 = vmatpush1.msra.mxu0 0.0
    %1320 = vmatprep.subr.mxu0 0.0
    %1321 = vmatpush1.msra.mxu0 0.0
    %1322 = vmatprep.subr.mxu0 0.0
    %1323 = vmatpush1.msra.mxu0 0.0
    %1324 = vmatprep.subr.mxu0 0.0
    %1325 = vmatpush1.msra.mxu0 0.0
    %1326 = vmatprep.subr.mxu0 0.0
    %1327 = vmatpush1.msra.mxu0 0.0
    %1328 = vmatprep.subr.mxu0 0.0
    %1329 = vmatpush1.msra.mxu0 0.0
    %1330 = vmatprep.subr.mxu0 0.0
    %1331 = vmatpush1.msra.mxu0 0.0
    %1332 = vmatprep.subr.mxu0 0.0
    %1333 = vmatpush1.msra.mxu0 0.0
    %1334 = vmatprep.subr.mxu0 0.0
    %1335 = vmatpush1.msra.mxu0 0.0
    %1336 = vmatprep.subr.mxu0 0.0
    %1337 = vmatpush1.msra.mxu0 0.0
    %1338 = vmatprep.subr.mxu0 0.0
    %1339 = vmatpush1.msra.mxu0 0.0
    %1340 = vmatprep.mubr.f32.mxu0 0.0
    %1341 = vmatmul.mubr.f32.gmra.mrb[0].mxu0 %v1259
    %v1342 = vpop.f32.mrb[0].mxu0
    %v1343 = vadd.f32 0.0, %v1342
    %v1344 = vpop.f32.mrb[0].mxu0
    %1345 = vdwg.mxu0
    %v1346 = vadd.f32 %v864, %v1343
    %v1347 = vld [vmem:[%s8] sm:$0x1]
    %v1349 = vlaneseq
    %v1350 = vshrl.u32 %v1349, 7
    %v1351 = vsub.s32 0, %v1350
    %v1352 = vrot.slane %v1347, %v1351
    %v1354 = vadd.f32 %v1346, %v1352
    %vm1355 = vcmask 31744
    %v1356 = vsel %vm1355, %v1354, -inf
    %1357 = vmax.xlane.f32.xlu0 %v1356
    %v1358 = vpop.xlane.xlu0 %1357
    %v1359 = vsub.f32 %v1354, %v1358
    %v1360 = vmul.f32 %v1359, 1.442695
    %v1361 = vpow.pop %v1360
    %v1362 = vsel %vm1355, %v1361, 0.0
    %1363 = vadd.xlane.f32.xlu0 %v1362
    %v1364 = vpop.xlane.xlu0 %1363
    %v1365 = vrcp.pop %v1364
    %v1366 = vmul.f32 %v1361, %v1365
    %v1367 = vadd.f32 %v367, %v866
    %v1368 = vadd.f32 %v436, %v935
    %v1369 = vadd.f32 %v438, %v937
    %v1370 = vadd.f32 %v507, %v1006
    %vm1371 = vcmp.gt.f32.partialorder %v1367, 0.0
    %vm1372 = vcmp.gt.f32.partialorder %v1368, 0.0
    %vm1373 = vcmp.gt.f32.partialorder %v1369, 0.0
    %vm1374 = vcmp.gt.f32.partialorder %v1370, 0.0
    %v1375 = vmin.f32 %v1367, 0.0
    %v1376 = vmin.f32 %v1368, 0.0
    %v1377 = vmin.f32 %v1369, 0.0
    %v1378 = vmin.f32 %v1370, 0.0
    %v1379 = vmul.f32 %v1375, 1.442695
    %v1380 = vpow.pop %v1379
    %v1381 = vmul.f32 %v1376, 1.442695
    %v1382 = vpow.pop %v1381
    %v1383 = vmul.f32 %v1377, 1.442695
    %v1384 = vpow.pop %v1383
    %v1385 = vmul.f32 %v1378, 1.442695
    %v1386 = vpow.pop %v1385
    %v1387 = vsub.f32 %v1380, 1.0
    %v1388 = vsub.f32 %v1382, 1.0
    %v1389 = vsub.f32 %v1384, 1.0
    %v1390 = vsub.f32 %v1386, 1.0
    %v1391 = vsel %vm1371, %v1367, %v1387
    %v1392 = vsel %vm1372, %v1368, %v1388
    %v1393 = vsel %vm1373, %v1369, %v1389
    %v1394 = vsel %vm1374, %v1370, %v1390
    %v1395 = vld [vmem:[#allocation8] sm:$0xff]
    %v1396 = vld [vmem:[#allocation8 + $0x8] sm:$0xff]
    %v1397 = vld [vmem:[#allocation8 + $0x10] sm:$0xff]
    %v1398 = vld [vmem:[#allocation8 + $0x18] sm:$0xff]
    %v1399 = vld [vmem:[#allocation8 + $0x20] sm:$0xff]
    %v1400 = vld [vmem:[#allocation8 + $0x28] sm:$0xff]
    %v1401 = vld [vmem:[#allocation8 + $0x30] sm:$0xff]
    %v1402 = vld [vmem:[#allocation8 + $0x38] sm:$0xff]
    %v1403 = vld [vmem:[#allocation8 + $0x40] sm:$0xff]
    %v1404 = vld [vmem:[#allocation8 + $0x48] sm:$0xff]
    %v1405 = vld [vmem:[#allocation8 + $0x50] sm:$0xff]
    %v1406 = vld [vmem:[#allocation8 + $0x58] sm:$0xff]
    %v1407 = vld [vmem:[#allocation8 + $0x60] sm:$0xff]
    %v1408 = vld [vmem:[#allocation8 + $0x68] sm:$0xff]
    %v1409 = vld [vmem:[#allocation8 + $0x70] sm:$0xff]
    %v1410 = vld [vmem:[#allocation8 + $0x78] sm:$0xff]
    %1411 = vmatprep.subr.mxu0 0.0
    %1412 = vmatpush1.msra.mxu0 %v1395
    %1413 = vmatprep.subr.mxu0 0.0
    %1414 = vmatpush1.msra.mxu0 %v1396
    %1415 = vmatprep.subr.mxu0 0.0
    %1416 = vmatpush1.msra.mxu0 %v1397
    %1417 = vmatprep.subr.mxu0 0.0
    %1418 = vmatpush1.msra.mxu0 %v1398
    %1419 = vmatprep.subr.mxu0 0.0
    %1420 = vmatpush1.msra.mxu0 %v1399
    %1421 = vmatprep.subr.mxu0 0.0
    %1422 = vmatpush1.msra.mxu0 %v1400
    %1423 = vmatprep.subr.mxu0 0.0
    %1424 = vmatpush1.msra.mxu0 %v1401
    %1425 = vmatprep.subr.mxu0 0.0
    %1426 = vmatpush1.msra.mxu0 %v1402
    %1427 = vmatprep.subr.mxu0 0.0
    %1428 = vmatpush1.msra.mxu0 %v1403
    %1429 = vmatprep.subr.mxu0 0.0
    %1430 = vmatpush1.msra.mxu0 %v1404
    %1431 = vmatprep.subr.mxu0 0.0
    %1432 = vmatpush1.msra.mxu0 %v1405
    %1433 = vmatprep.subr.mxu0 0.0
    %1434 = vmatpush1.msra.mxu0 %v1406
    %1435 = vmatprep.subr.mxu0 0.0
    %1436 = vmatpush1.msra.mxu0 %v1407
    %1437 = vmatprep.subr.mxu0 0.0
    %1438 = vmatpush1.msra.mxu0 %v1408
    %1439 = vmatprep.subr.mxu0 0.0
    %1440 = vmatpush1.msra.mxu0 %v1409
    %1441 = vmatprep.subr.mxu0 0.0
    %1442 = vmatpush1.msra.mxu0 %v1410
    %1443 = vmatprep.subr.mxu0 0.0
    %1444 = vmatpush1.msra.mxu0 0.0
    %1445 = vmatprep.subr.mxu0 0.0
    %1446 = vmatpush1.msra.mxu0 0.0
    %1447 = vmatprep.subr.mxu0 0.0
    %1448 = vmatpush1.msra.mxu0 0.0
    %1449 = vmatprep.subr.mxu0 0.0
    %1450 = vmatpush1.msra.mxu0 0.0
    %1451 = vmatprep.subr.mxu0 0.0
    %1452 = vmatpush1.msra.mxu0 0.0
    %1453 = vmatprep.subr.mxu0 0.0
    %1454 = vmatpush1.msra.mxu0 0.0
    %1455 = vmatprep.subr.mxu0 0.0
    %1456 = vmatpush1.msra.mxu0 0.0
    %1457 = vmatprep.subr.mxu0 0.0
    %1458 = vmatpush1.msra.mxu0 0.0
    %1459 = vmatprep.subr.mxu0 0.0
    %1460 = vmatpush1.msra.mxu0 0.0
    %1461 = vmatprep.subr.mxu0 0.0
    %1462 = vmatpush1.msra.mxu0 0.0
    %1463 = vmatprep.subr.mxu0 0.0
    %1464 = vmatpush1.msra.mxu0 0.0
    %1465 = vmatprep.subr.mxu0 0.0
    %1466 = vmatpush1.msra.mxu0 0.0
    %1467 = vmatprep.subr.mxu0 0.0
    %1468 = vmatpush1.msra.mxu0 0.0
    %1469 = vmatprep.subr.mxu0 0.0
    %1470 = vmatpush1.msra.mxu0 0.0
    %1471 = vmatprep.subr.mxu0 0.0
    %1472 = vmatpush1.msra.mxu0 0.0
    %1473 = vmatprep.subr.mxu0 0.0
    %1474 = vmatpush1.msra.mxu0 0.0
    %1475 = vmatprep.mubr.f32.mxu0 0.0
    %1476 = vmatmul.mubr.f32.gmra.mrb[0].mxu0 %v1391
    %v1477 = vpop.f32.mrb[0].mxu0
    %v1478 = vadd.f32 0.0, %v1477
    %v1479 = vpop.f32.mrb[0].mxu0
    %1480 = vdwg.mxu0
    %v1481 = vadd.f32 %v1008, %v1478
    %v1482 = vld [vmem:[%s10] sm:$0x1]
    %v1484 = vlaneseq
    %v1485 = vshrl.u32 %v1484, 7
    %v1486 = vsub.s32 0, %v1485
    %v1487 = vrot.slane %v1482, %v1486
    %v1489 = vadd.f32 %v1481, %v1487
    %vm1490 = vcmp.gt.f32.partialorder %v1489, 0.0
    %v1491 = vmin.f32 %v1489, 0.0
    %v1492 = vmul.f32 %v1491, 1.442695
    %v1493 = vpow.pop %v1492
    %v1494 = vsub.f32 %v1493, 1.0
    %v1495 = vsel %vm1490, %v1489, %v1494
    %v1496 = vld [vmem:[#allocation8 + $0x80] sm:$0xff]
    %v1497 = vld [vmem:[#allocation8 + $0x88] sm:$0xff]
    %v1498 = vld [vmem:[#allocation8 + $0x90] sm:$0xff]
    %v1499 = vld [vmem:[#allocation8 + $0x98] sm:$0xff]
    %v1500 = vld [vmem:[#allocation8 + $0xa0] sm:$0xff]
    %v1501 = vld [vmem:[#allocation8 + $0xa8] sm:$0xff]
    %v1502 = vld [vmem:[#allocation8 + $0xb0] sm:$0xff]
    %v1503 = vld [vmem:[#allocation8 + $0xb8] sm:$0xff]
    %v1504 = vld [vmem:[#allocation8 + $0xc0] sm:$0xff]
    %v1505 = vld [vmem:[#allocation8 + $0xc8] sm:$0xff]
    %v1506 = vld [vmem:[#allocation8 + $0xd0] sm:$0xff]
    %v1507 = vld [vmem:[#allocation8 + $0xd8] sm:$0xff]
    %v1508 = vld [vmem:[#allocation8 + $0xe0] sm:$0xff]
    %v1509 = vld [vmem:[#allocation8 + $0xe8] sm:$0xff]
    %v1510 = vld [vmem:[#allocation8 + $0xf0] sm:$0xff]
    %v1511 = vld [vmem:[#allocation8 + $0xf8] sm:$0xff]
    %1512 = vmatprep.subr.mxu0 0.0
    %1513 = vmatpush1.msra.mxu0 %v1496
    %1514 = vmatprep.subr.mxu0 0.0
    %1515 = vmatpush1.msra.mxu0 %v1497
    %1516 = vmatprep.subr.mxu0 0.0
    %1517 = vmatpush1.msra.mxu0 %v1498
    %1518 = vmatprep.subr.mxu0 0.0
    %1519 = vmatpush1.msra.mxu0 %v1499
    %1520 = vmatprep.subr.mxu0 0.0
    %1521 = vmatpush1.msra.mxu0 %v1500
    %1522 = vmatprep.subr.mxu0 0.0
    %1523 = vmatpush1.msra.mxu0 %v1501
    %1524 = vmatprep.subr.mxu0 0.0
    %1525 = vmatpush1.msra.mxu0 %v1502
    %1526 = vmatprep.subr.mxu0 0.0
    %1527 = vmatpush1.msra.mxu0 %v1503
    %1528 = vmatprep.subr.mxu0 0.0
    %1529 = vmatpush1.msra.mxu0 %v1504
    %1530 = vmatprep.subr.mxu0 0.0
    %1531 = vmatpush1.msra.mxu0 %v1505
    %1532 = vmatprep.subr.mxu0 0.0
    %1533 = vmatpush1.msra.mxu0 %v1506
    %1534 = vmatprep.subr.mxu0 0.0
    %1535 = vmatpush1.msra.mxu0 %v1507
    %1536 = vmatprep.subr.mxu0 0.0
    %1537 = vmatpush1.msra.mxu0 %v1508
    %1538 = vmatprep.subr.mxu0 0.0
    %1539 = vmatpush1.msra.mxu0 %v1509
    %1540 = vmatprep.subr.mxu0 0.0
    %1541 = vmatpush1.msra.mxu0 %v1510
    %1542 = vmatprep.subr.mxu0 0.0
    %1543 = vmatpush1.msra.mxu0 %v1511
    %1544 = vmatprep.subr.mxu0 0.0
    %1545 = vmatpush1.msra.mxu0 0.0
    %1546 = vmatprep.subr.mxu0 0.0
    %1547 = vmatpush1.msra.mxu0 0.0
    %1548 = vmatprep.subr.mxu0 0.0
    %1549 = vmatpush1.msra.mxu0 0.0
    %1550 = vmatprep.subr.mxu0 0.0
    %1551 = vmatpush1.msra.mxu0 0.0
    %1552 = vmatprep.subr.mxu0 0.0
    %1553 = vmatpush1.msra.mxu0 0.0
    %1554 = vmatprep.subr.mxu0 0.0
    %1555 = vmatpush1.msra.mxu0 0.0
    %1556 = vmatprep.subr.mxu0 0.0
    %1557 = vmatpush1.msra.mxu0 0.0
    %1558 = vmatprep.subr.mxu0 0.0
    %1559 = vmatpush1.msra.mxu0 0.0
    %1560 = vmatprep.subr.mxu0 0.0
    %1561 = vmatpush1.msra.mxu0 0.0
    %1562 = vmatprep.subr.mxu0 0.0
    %1563 = vmatpush1.msra.mxu0 0.0
    %1564 = vmatprep.subr.mxu0 0.0
    %1565 = vmatpush1.msra.mxu0 0.0
    %1566 = vmatprep.subr.mxu0 0.0
    %1567 = vmatpush1.msra.mxu0 0.0
    %1568 = vmatprep.subr.mxu0 0.0
    %1569 = vmatpush1.msra.mxu0 0.0
    %1570 = vmatprep.subr.mxu0 0.0
    %1571 = vmatpush1.msra.mxu0 0.0
    %1572 = vmatprep.subr.mxu0 0.0
    %1573 = vmatpush1.msra.mxu0 0.0
    %1574 = vmatprep.subr.mxu0 0.0
    %1575 = vmatpush1.msra.mxu0 0.0
    %1576 = vmatprep.mubr.f32.mxu0 0.0
    %1577 = vmatmul.mubr.f32.gmra.mrb[0].mxu0 %v1392
    %v1578 = vpop.f32.mrb[0].mxu0
    %v1579 = vadd.f32 0.0, %v1578
    %v1580 = vpop.f32.mrb[0].mxu0
    %1581 = vdwg.mxu0
    %v1582 = vadd.f32 %v1077, %v1579
    %v1583 = vld [vmem:[%s10 + $0x1] sm:$0x1]
    %v1585 = vlaneseq
    %v1586 = vshrl.u32 %v1585, 7
    %v1587 = vsub.s32 0, %v1586
    %v1588 = vrot.slane %v1583, %v1587
    %v1590 = vadd.f32 %v1582, %v1588
    %vm1591 = vcmp.gt.f32.partialorder %v1590, 0.0
    %v1592 = vmin.f32 %v1590, 0.0
    %v1593 = vmul.f32 %v1592, 1.442695
    %v1594 = vpow.pop %v1593
    %v1595 = vsub.f32 %v1594, 1.0
    %v1596 = vsel %vm1591, %v1590, %v1595
    %v1597 = vld [vmem:[#allocation8 + $0x100] sm:$0xff]
    %v1598 = vld [vmem:[#allocation8 + $0x108] sm:$0xff]
    %v1599 = vld [vmem:[#allocation8 + $0x110] sm:$0xff]
    %v1600 = vld [vmem:[#allocation8 + $0x118] sm:$0xff]
    %v1601 = vld [vmem:[#allocation8 + $0x120] sm:$0xff]
    %v1602 = vld [vmem:[#allocation8 + $0x128] sm:$0xff]
    %v1603 = vld [vmem:[#allocation8 + $0x130] sm:$0xff]
    %v1604 = vld [vmem:[#allocation8 + $0x138] sm:$0xff]
    %v1605 = vld [vmem:[#allocation8 + $0x140] sm:$0xff]
    %v1606 = vld [vmem:[#allocation8 + $0x148] sm:$0xff]
    %v1607 = vld [vmem:[#allocation8 + $0x150] sm:$0xff]
    %v1608 = vld [vmem:[#allocation8 + $0x158] sm:$0xff]
    %v1609 = vld [vmem:[#allocation8 + $0x160] sm:$0xff]
    %v1610 = vld [vmem:[#allocation8 + $0x168] sm:$0xff]
    %v1611 = vld [vmem:[#allocation8 + $0x170] sm:$0xff]
    %v1612 = vld [vmem:[#allocation8 + $0x178] sm:$0xff]
    %1613 = vmatprep.subr.mxu0 0.0
    %1614 = vmatpush1.msra.mxu0 %v1597
    %1615 = vmatprep.subr.mxu0 0.0
    %1616 = vmatpush1.msra.mxu0 %v1598
    %1617 = vmatprep.subr.mxu0 0.0
    %1618 = vmatpush1.msra.mxu0 %v1599
    %1619 = vmatprep.subr.mxu0 0.0
    %1620 = vmatpush1.msra.mxu0 %v1600
    %1621 = vmatprep.subr.mxu0 0.0
    %1622 = vmatpush1.msra.mxu0 %v1601
    %1623 = vmatprep.subr.mxu0 0.0
    %1624 = vmatpush1.msra.mxu0 %v1602
    %1625 = vmatprep.subr.mxu0 0.0
    %1626 = vmatpush1.msra.mxu0 %v1603
    %1627 = vmatprep.subr.mxu0 0.0
    %1628 = vmatpush1.msra.mxu0 %v1604
    %1629 = vmatprep.subr.mxu0 0.0
    %1630 = vmatpush1.msra.mxu0 %v1605
    %1631 = vmatprep.subr.mxu0 0.0
    %1632 = vmatpush1.msra.mxu0 %v1606
    %1633 = vmatprep.subr.mxu0 0.0
    %1634 = vmatpush1.msra.mxu0 %v1607
    %1635 = vmatprep.subr.mxu0 0.0
    %1636 = vmatpush1.msra.mxu0 %v1608
    %1637 = vmatprep.subr.mxu0 0.0
    %1638 = vmatpush1.msra.mxu0 %v1609
    %1639 = vmatprep.subr.mxu0 0.0
    %1640 = vmatpush1.msra.mxu0 %v1610
    %1641 = vmatprep.subr.mxu0 0.0
    %1642 = vmatpush1.msra.mxu0 %v1611
    %1643 = vmatprep.subr.mxu0 0.0
    %1644 = vmatpush1.msra.mxu0 %v1612
    %1645 = vmatprep.subr.mxu0 0.0
    %1646 = vmatpush1.msra.mxu0 0.0
    %1647 = vmatprep.subr.mxu0 0.0
    %1648 = vmatpush1.msra.mxu0 0.0
    %1649 = vmatprep.subr.mxu0 0.0
    %1650 = vmatpush1.msra.mxu0 0.0
    %1651 = vmatprep.subr.mxu0 0.0
    %1652 = vmatpush1.msra.mxu0 0.0
    %1653 = vmatprep.subr.mxu0 0.0
    %1654 = vmatpush1.msra.mxu0 0.0
    %1655 = vmatprep.subr.mxu0 0.0
    %1656 = vmatpush1.msra.mxu0 0.0
    %1657 = vmatprep.subr.mxu0 0.0
    %1658 = vmatpush1.msra.mxu0 0.0
    %1659 = vmatprep.subr.mxu0 0.0
    %1660 = vmatpush1.msra.mxu0 0.0
    %1661 = vmatprep.subr.mxu0 0.0
    %1662 = vmatpush1.msra.mxu0 0.0
    %1663 = vmatprep.subr.mxu0 0.0
    %1664 = vmatpush1.msra.mxu0 0.0
    %1665 = vmatprep.subr.mxu0 0.0
    %1666 = vmatpush1.msra.mxu0 0.0
    %1667 = vmatprep.subr.mxu0 0.0
    %1668 = vmatpush1.msra.mxu0 0.0
    %1669 = vmatprep.subr.mxu0 0.0
    %1670 = vmatpush1.msra.mxu0 0.0
    %1671 = vmatprep.subr.mxu0 0.0
    %1672 = vmatpush1.msra.mxu0 0.0
    %1673 = vmatprep.subr.mxu0 0.0
    %1674 = vmatpush1.msra.mxu0 0.0
    %1675 = vmatprep.subr.mxu0 0.0
    %1676 = vmatpush1.msra.mxu0 0.0
    %1677 = vmatprep.mubr.f32.mxu0 0.0
    %1678 = vmatmul.mubr.f32.gmra.mrb[0].mxu0 %v1393
    %v1679 = vpop.f32.mrb[0].mxu0
    %v1680 = vadd.f32 0.0, %v1679
    %v1681 = vpop.f32.mrb[0].mxu0
    %1682 = vdwg.mxu0
    %v1683 = vadd.f32 %v1079, %v1680
    %v1684 = vld [vmem:[%s10 + $0x2] sm:$0x1]
    %v1686 = vlaneseq
    %v1687 = vshrl.u32 %v1686, 7
    %v1688 = vsub.s32 0, %v1687
    %v1689 = vrot.slane %v1684, %v1688
    %v1691 = vadd.f32 %v1683, %v1689
    %vm1692 = vcmp.gt.f32.partialorder %v1691, 0.0
    %v1693 = vmin.f32 %v1691, 0.0
    %v1694 = vmul.f32 %v1693, 1.442695
    %v1695 = vpow.pop %v1694
    %v1696 = vsub.f32 %v1695, 1.0
    %v1697 = vsel %vm1692, %v1691, %v1696
    %v1698 = vld [vmem:[#allocation8 + $0x180] sm:$0xff]
    %v1699 = vld [vmem:[#allocation8 + $0x188] sm:$0xff]
    %v1700 = vld [vmem:[#allocation8 + $0x190] sm:$0xff]
    %v1701 = vld [vmem:[#allocation8 + $0x198] sm:$0xff]
    %v1702 = vld [vmem:[#allocation8 + $0x1a0] sm:$0xff]
    %v1703 = vld [vmem:[#allocation8 + $0x1a8] sm:$0xff]
    %v1704 = vld [vmem:[#allocation8 + $0x1b0] sm:$0xff]
    %v1705 = vld [vmem:[#allocation8 + $0x1b8] sm:$0xff]
    %v1706 = vld [vmem:[#allocation8 + $0x1c0] sm:$0xff]
    %v1707 = vld [vmem:[#allocation8 + $0x1c8] sm:$0xff]
    %v1708 = vld [vmem:[#allocation8 + $0x1d0] sm:$0xff]
    %v1709 = vld [vmem:[#allocation8 + $0x1d8] sm:$0xff]
    %v1710 = vld [vmem:[#allocation8 + $0x1e0] sm:$0xff]
    %v1711 = vld [vmem:[#allocation8 + $0x1e8] sm:$0xff]
    %v1712 = vld [vmem:[#allocation8 + $0x1f0] sm:$0xff]
    %v1713 = vld [vmem:[#allocation8 + $0x1f8] sm:$0xff]
    %1714 = vmatprep.subr.mxu0 0.0
    %1715 = vmatpush1.msra.mxu0 %v1698
    %1716 = vmatprep.subr.mxu0 0.0
    %1717 = vmatpush1.msra.mxu0 %v1699
    %1718 = vmatprep.subr.mxu0 0.0
    %1719 = vmatpush1.msra.mxu0 %v1700
    %1720 = vmatprep.subr.mxu0 0.0
    %1721 = vmatpush1.msra.mxu0 %v1701
    %1722 = vmatprep.subr.mxu0 0.0
    %1723 = vmatpush1.msra.mxu0 %v1702
    %1724 = vmatprep.subr.mxu0 0.0
    %1725 = vmatpush1.msra.mxu0 %v1703
    %1726 = vmatprep.subr.mxu0 0.0
    %1727 = vmatpush1.msra.mxu0 %v1704
    %1728 = vmatprep.subr.mxu0 0.0
    %1729 = vmatpush1.msra.mxu0 %v1705
    %1730 = vmatprep.subr.mxu0 0.0
    %1731 = vmatpush1.msra.mxu0 %v1706
    %1732 = vmatprep.subr.mxu0 0.0
    %1733 = vmatpush1.msra.mxu0 %v1707
    %1734 = vmatprep.subr.mxu0 0.0
    %1735 = vmatpush1.msra.mxu0 %v1708
    %1736 = vmatprep.subr.mxu0 0.0
    %1737 = vmatpush1.msra.mxu0 %v1709
    %1738 = vmatprep.subr.mxu0 0.0
    %1739 = vmatpush1.msra.mxu0 %v1710
    %1740 = vmatprep.subr.mxu0 0.0
    %1741 = vmatpush1.msra.mxu0 %v1711
    %1742 = vmatprep.subr.mxu0 0.0
    %1743 = vmatpush1.msra.mxu0 %v1712
    %1744 = vmatprep.subr.mxu0 0.0
    %1745 = vmatpush1.msra.mxu0 %v1713
    %1746 = vmatprep.subr.mxu0 0.0
    %1747 = vmatpush1.msra.mxu0 0.0
    %1748 = vmatprep.subr.mxu0 0.0
    %1749 = vmatpush1.msra.mxu0 0.0
    %1750 = vmatprep.subr.mxu0 0.0
    %1751 = vmatpush1.msra.mxu0 0.0
    %1752 = vmatprep.subr.mxu0 0.0
    %1753 = vmatpush1.msra.mxu0 0.0
    %1754 = vmatprep.subr.mxu0 0.0
    %1755 = vmatpush1.msra.mxu0 0.0
    %1756 = vmatprep.subr.mxu0 0.0
    %1757 = vmatpush1.msra.mxu0 0.0
    %1758 = vmatprep.subr.mxu0 0.0
    %1759 = vmatpush1.msra.mxu0 0.0
    %1760 = vmatprep.subr.mxu0 0.0
    %1761 = vmatpush1.msra.mxu0 0.0
    %1762 = vmatprep.subr.mxu0 0.0
    %1763 = vmatpush1.msra.mxu0 0.0
    %1764 = vmatprep.subr.mxu0 0.0
    %1765 = vmatpush1.msra.mxu0 0.0
    %1766 = vmatprep.subr.mxu0 0.0
    %1767 = vmatpush1.msra.mxu0 0.0
    %1768 = vmatprep.subr.mxu0 0.0
    %1769 = vmatpush1.msra.mxu0 0.0
    %1770 = vmatprep.subr.mxu0 0.0
    %1771 = vmatpush1.msra.mxu0 0.0
    %1772 = vmatprep.subr.mxu0 0.0
    %1773 = vmatpush1.msra.mxu0 0.0
    %1774 = vmatprep.subr.mxu0 0.0
    %1775 = vmatpush1.msra.mxu0 0.0
    %1776 = vmatprep.subr.mxu0 0.0
    %1777 = vmatpush1.msra.mxu0 0.0
    %1778 = vmatprep.mubr.f32.mxu0 0.0
    %1779 = vmatmul.mubr.f32.gmra.mrb[0].mxu0 %v1394
    %v1780 = vpop.f32.mrb[0].mxu0
    %v1781 = vadd.f32 0.0, %v1780
    %v1782 = vpop.f32.mrb[0].mxu0
    %1783 = vdwg.mxu0
    %v1784 = vadd.f32 %v1148, %v1781
    %v1785 = vld [vmem:[%s10 + $0x3] sm:$0x1]
    %v1787 = vlaneseq
    %v1788 = vshrl.u32 %v1787, 7
    %v1789 = vsub.s32 0, %v1788
    %v1790 = vrot.slane %v1785, %v1789
    %v1792 = vadd.f32 %v1784, %v1790
    %vm1793 = vcmp.gt.f32.partialorder %v1792, 0.0
    %v1794 = vmin.f32 %v1792, 0.0
    %v1795 = vmul.f32 %v1794, 1.442695
    %v1796 = vpow.pop %v1795
    %v1797 = vsub.f32 %v1796, 1.0
    %v1798 = vsel %vm1793, %v1792, %v1797
    %v1799 = vld [vmem:[%s11] sm:$0xff]
    %v1800 = vld [vmem:[%s11 + $0x8] sm:$0xff]
    %v1801 = vld [vmem:[%s11 + $0x10] sm:$0xff]
    %v1802 = vld [vmem:[%s11 + $0x18] sm:$0xff]
    %v1803 = vld [vmem:[%s11 + $0x20] sm:$0xff]
    %v1804 = vld [vmem:[%s11 + $0x28] sm:$0xff]
    %v1805 = vld [vmem:[%s11 + $0x30] sm:$0xff]
    %v1806 = vld [vmem:[%s11 + $0x38] sm:$0xff]
    %v1807 = vld [vmem:[%s11 + $0x40] sm:$0xff]
    %v1808 = vld [vmem:[%s11 + $0x48] sm:$0xff]
    %v1809 = vld [vmem:[%s11 + $0x50] sm:$0xff]
    %v1810 = vld [vmem:[%s11 + $0x58] sm:$0xff]
    %v1811 = vld [vmem:[%s11 + $0x60] sm:$0xff]
    %v1812 = vld [vmem:[%s11 + $0x68] sm:$0xff]
    %v1813 = vld [vmem:[%s11 + $0x70] sm:$0xff]
    %v1814 = vld [vmem:[%s11 + $0x78] sm:$0xff]
    %v1815 = vld [vmem:[%s11 + $0x80] sm:$0xff]
    %v1816 = vld [vmem:[%s11 + $0x88] sm:$0xff]
    %v1817 = vld [vmem:[%s11 + $0x90] sm:$0xff]
    %v1818 = vld [vmem:[%s11 + $0x98] sm:$0xff]
    %v1819 = vld [vmem:[%s11 + $0xa0] sm:$0xff]
    %v1820 = vld [vmem:[%s11 + $0xa8] sm:$0xff]
    %v1821 = vld [vmem:[%s11 + $0xb0] sm:$0xff]
    %v1822 = vld [vmem:[%s11 + $0xb8] sm:$0xff]
    %v1823 = vld [vmem:[%s11 + $0xc0] sm:$0xff]
    %v1824 = vld [vmem:[%s11 + $0xc8] sm:$0xff]
    %v1825 = vld [vmem:[%s11 + $0xd0] sm:$0xff]
    %v1826 = vld [vmem:[%s11 + $0xd8] sm:$0xff]
    %v1827 = vld [vmem:[%s11 + $0xe0] sm:$0xff]
    %v1828 = vld [vmem:[%s11 + $0xe8] sm:$0xff]
    %v1829 = vld [vmem:[%s11 + $0xf0] sm:$0xff]
    %v1830 = vld [vmem:[%s11 + $0xf8] sm:$0xff]
    %v1831 = vld [vmem:[%s11 + $0x100] sm:$0xff]
    %v1832 = vld [vmem:[%s11 + $0x108] sm:$0xff]
    %v1833 = vld [vmem:[%s11 + $0x110] sm:$0xff]
    %v1834 = vld [vmem:[%s11 + $0x118] sm:$0xff]
    %v1835 = vld [vmem:[%s11 + $0x120] sm:$0xff]
    %v1836 = vld [vmem:[%s11 + $0x128] sm:$0xff]
    %v1837 = vld [vmem:[%s11 + $0x130] sm:$0xff]
    %v1838 = vld [vmem:[%s11 + $0x138] sm:$0xff]
    %v1839 = vld [vmem:[%s11 + $0x140] sm:$0xff]
    %v1840 = vld [vmem:[%s11 + $0x148] sm:$0xff]
    %v1841 = vld [vmem:[%s11 + $0x150] sm:$0xff]
    %v1842 = vld [vmem:[%s11 + $0x158] sm:$0xff]
    %v1843 = vld [vmem:[%s11 + $0x160] sm:$0xff]
    %v1844 = vld [vmem:[%s11 + $0x168] sm:$0xff]
    %v1845 = vld [vmem:[%s11 + $0x170] sm:$0xff]
    %v1846 = vld [vmem:[%s11 + $0x178] sm:$0xff]
    %v1847 = vld [vmem:[%s11 + $0x180] sm:$0xff]
    %v1848 = vld [vmem:[%s11 + $0x188] sm:$0xff]
    %v1849 = vld [vmem:[%s11 + $0x190] sm:$0xff]
    %v1850 = vld [vmem:[%s11 + $0x198] sm:$0xff]
    %v1851 = vld [vmem:[%s11 + $0x1a0] sm:$0xff]
    %v1852 = vld [vmem:[%s11 + $0x1a8] sm:$0xff]
    %v1853 = vld [vmem:[%s11 + $0x1b0] sm:$0xff]
    %v1854 = vld [vmem:[%s11 + $0x1b8] sm:$0xff]
    %v1855 = vld [vmem:[%s11 + $0x1c0] sm:$0xff]
    %v1856 = vld [vmem:[%s11 + $0x1c8] sm:$0xff]
    %v1857 = vld [vmem:[%s11 + $0x1d0] sm:$0xff]
    %v1858 = vld [vmem:[%s11 + $0x1d8] sm:$0xff]
    %v1859 = vld [vmem:[%s11 + $0x1e0] sm:$0xff]
    %v1860 = vld [vmem:[%s11 + $0x1e8] sm:$0xff]
    %v1861 = vld [vmem:[%s11 + $0x1f0] sm:$0xff]
    %v1862 = vld [vmem:[%s11 + $0x1f8] sm:$0xff]
    %1863 = vmatprep.subr.mxu0 0.0
    %1864 = vmatpush1.msra.mxu0 %v1799
    %1865 = vmatprep.subr.mxu0 0.0
    %1866 = vmatpush1.msra.mxu0 %v1800
    %1867 = vmatprep.subr.mxu0 0.0
    %1868 = vmatpush1.msra.mxu0 %v1801
    %1869 = vmatprep.subr.mxu0 0.0
    %1870 = vmatpush1.msra.mxu0 %v1802
    %1871 = vmatprep.subr.mxu0 0.0
    %1872 = vmatpush1.msra.mxu0 %v1803
    %1873 = vmatprep.subr.mxu0 0.0
    %1874 = vmatpush1.msra.mxu0 %v1804
    %1875 = vmatprep.subr.mxu0 0.0
    %1876 = vmatpush1.msra.mxu0 %v1805
    %1877 = vmatprep.subr.mxu0 0.0
    %1878 = vmatpush1.msra.mxu0 %v1806
    %1879 = vmatprep.subr.mxu0 0.0
    %1880 = vmatpush1.msra.mxu0 %v1807
    %1881 = vmatprep.subr.mxu0 0.0
    %1882 = vmatpush1.msra.mxu0 %v1808
    %1883 = vmatprep.subr.mxu0 0.0
    %1884 = vmatpush1.msra.mxu0 %v1809
    %1885 = vmatprep.subr.mxu0 0.0
    %1886 = vmatpush1.msra.mxu0 %v1810
    %1887 = vmatprep.subr.mxu0 0.0
    %1888 = vmatpush1.msra.mxu0 %v1811
    %1889 = vmatprep.subr.mxu0 0.0
    %1890 = vmatpush1.msra.mxu0 %v1812
    %1891 = vmatprep.subr.mxu0 0.0
    %1892 = vmatpush1.msra.mxu0 %v1813
    %1893 = vmatprep.subr.mxu0 0.0
    %1894 = vmatpush1.msra.mxu0 %v1814
    %1895 = vmatprep.subr.mxu0 0.0
    %1896 = vmatpush1.msra.mxu0 %v1815
    %1897 = vmatprep.subr.mxu0 0.0
    %1898 = vmatpush1.msra.mxu0 %v1816
    %1899 = vmatprep.subr.mxu0 0.0
    %1900 = vmatpush1.msra.mxu0 %v1817
    %1901 = vmatprep.subr.mxu0 0.0
    %1902 = vmatpush1.msra.mxu0 %v1818
    %1903 = vmatprep.subr.mxu0 0.0
    %1904 = vmatpush1.msra.mxu0 %v1819
    %1905 = vmatprep.subr.mxu0 0.0
    %1906 = vmatpush1.msra.mxu0 %v1820
    %1907 = vmatprep.subr.mxu0 0.0
    %1908 = vmatpush1.msra.mxu0 %v1821
    %1909 = vmatprep.subr.mxu0 0.0
    %1910 = vmatpush1.msra.mxu0 %v1822
    %1911 = vmatprep.subr.mxu0 0.0
    %1912 = vmatpush1.msra.mxu0 %v1823
    %1913 = vmatprep.subr.mxu0 0.0
    %1914 = vmatpush1.msra.mxu0 %v1824
    %1915 = vmatprep.subr.mxu0 0.0
    %1916 = vmatpush1.msra.mxu0 %v1825
    %1917 = vmatprep.subr.mxu0 0.0
    %1918 = vmatpush1.msra.mxu0 %v1826
    %1919 = vmatprep.subr.mxu0 0.0
    %1920 = vmatpush1.msra.mxu0 %v1827
    %1921 = vmatprep.subr.mxu0 0.0
    %1922 = vmatpush1.msra.mxu0 %v1828
    %1923 = vmatprep.subr.mxu0 0.0
    %1924 = vmatpush1.msra.mxu0 %v1829
    %1925 = vmatprep.subr.mxu0 0.0
    %1926 = vmatpush1.msra.mxu0 %v1830
    %1927 = vmatprep.mubr.f32.mxu0 %v1596
    %1928 = vmatmul.mubr.f32.gmra.mrb[0].mxu0 %v1495
    %v1929 = vpop.f32.mrb[0].mxu0
    %v1930 = vadd.f32 0.0, %v1929
    %v1931 = vpop.f32.mrb[0].mxu0
    %1932 = vdwg.mxu0
    %1933 = vmatprep.subr.mxu0 0.0
    %1934 = vmatpush1.msra.mxu0 %v1831
    %1935 = vmatprep.subr.mxu0 0.0
    %1936 = vmatpush1.msra.mxu0 %v1832
    %1937 = vmatprep.subr.mxu0 0.0
    %1938 = vmatpush1.msra.mxu0 %v1833
    %1939 = vmatprep.subr.mxu0 0.0
    %1940 = vmatpush1.msra.mxu0 %v1834
    %1941 = vmatprep.subr.mxu0 0.0
    %1942 = vmatpush1.msra.mxu0 %v1835
    %1943 = vmatprep.subr.mxu0 0.0
    %1944 = vmatpush1.msra.mxu0 %v1836
    %1945 = vmatprep.subr.mxu0 0.0
    %1946 = vmatpush1.msra.mxu0 %v1837
    %1947 = vmatprep.subr.mxu0 0.0
    %1948 = vmatpush1.msra.mxu0 %v1838
    %1949 = vmatprep.subr.mxu0 0.0
    %1950 = vmatpush1.msra.mxu0 %v1839
    %1951 = vmatprep.subr.mxu0 0.0
    %1952 = vmatpush1.msra.mxu0 %v1840
    %1953 = vmatprep.subr.mxu0 0.0
    %1954 = vmatpush1.msra.mxu0 %v1841
    %1955 = vmatprep.subr.mxu0 0.0
    %1956 = vmatpush1.msra.mxu0 %v1842
    %1957 = vmatprep.subr.mxu0 0.0
    %1958 = vmatpush1.msra.mxu0 %v1843
    %1959 = vmatprep.subr.mxu0 0.0
    %1960 = vmatpush1.msra.mxu0 %v1844
    %1961 = vmatprep.subr.mxu0 0.0
    %1962 = vmatpush1.msra.mxu0 %v1845
    %1963 = vmatprep.subr.mxu0 0.0
    %1964 = vmatpush1.msra.mxu0 %v1846
    %1965 = vmatprep.subr.mxu0 0.0
    %1966 = vmatpush1.msra.mxu0 %v1847
    %1967 = vmatprep.subr.mxu0 0.0
    %1968 = vmatpush1.msra.mxu0 %v1848
    %1969 = vmatprep.subr.mxu0 0.0
    %1970 = vmatpush1.msra.mxu0 %v1849
    %1971 = vmatprep.subr.mxu0 0.0
    %1972 = vmatpush1.msra.mxu0 %v1850
    %1973 = vmatprep.subr.mxu0 0.0
    %1974 = vmatpush1.msra.mxu0 %v1851
    %1975 = vmatprep.subr.mxu0 0.0
    %1976 = vmatpush1.msra.mxu0 %v1852
    %1977 = vmatprep.subr.mxu0 0.0
    %1978 = vmatpush1.msra.mxu0 %v1853
    %1979 = vmatprep.subr.mxu0 0.0
    %1980 = vmatpush1.msra.mxu0 %v1854
    %1981 = vmatprep.subr.mxu0 0.0
    %1982 = vmatpush1.msra.mxu0 %v1855
    %1983 = vmatprep.subr.mxu0 0.0
    %1984 = vmatpush1.msra.mxu0 %v1856
    %1985 = vmatprep.subr.mxu0 0.0
    %1986 = vmatpush1.msra.mxu0 %v1857
    %1987 = vmatprep.subr.mxu0 0.0
    %1988 = vmatpush1.msra.mxu0 %v1858
    %1989 = vmatprep.subr.mxu0 0.0
    %1990 = vmatpush1.msra.mxu0 %v1859
    %1991 = vmatprep.subr.mxu0 0.0
    %1992 = vmatpush1.msra.mxu0 %v1860
    %1993 = vmatprep.subr.mxu0 0.0
    %1994 = vmatpush1.msra.mxu0 %v1861
    %1995 = vmatprep.subr.mxu0 0.0
    %1996 = vmatpush1.msra.mxu0 %v1862
    %1997 = vmatprep.mubr.f32.mxu0 %v1798
    %1998 = vmatmul.mubr.f32.gmra.mrb[0].mxu0 %v1697
    %v1999 = vpop.f32.mrb[0].mxu0
    %v2000 = vadd.f32 %v1930, %v1999
    %v2001 = vpop.f32.mrb[0].mxu0
    %2002 = vdwg.mxu0
    %v2003 = vadd.f32 %v1150, %v2000
    %v2004 = vld [vmem:[%s12] sm:$0x1]
    %v2006 = vlaneseq
    %v2007 = vshrl.u32 %v2006, 7
    %v2008 = vsub.s32 0, %v2007
    %v2009 = vrot.slane %v2004, %v2008
    %v2011 = vadd.f32 %v2003, %v2009
    %vm2012 = vcmask 523264
    %2013 = vst.msk [vmem:[#allocation10] sm:$0xff] %vm2012, %v2011
    %2015 = vrot.lane.b32.xlu0 %v696, 64
    %v2016 = vpop.permute.xlu0 %2015
    %vm2018 = vcmask 589312
    %2019 = vst.msk [vmem:[#allocation10] sm:$0xff] %vm2018, %v2016
    %vm2020 = vcmask 654912
    %2021 = vst.msk [vmem:[#allocation10] sm:$0xff] %vm2020, %v2016
    %2023 = vrot.lane.b32.xlu0 %v1366, 80
    %v2024 = vpop.permute.xlu0 %2023
    %vm2026 = vcmask 687744
    %2027 = vst.msk [vmem:[#allocation10] sm:$0xff] %vm2026, %v2024
    %vm2028 = vcmask 1048224
    %2029 = vst.msk [vmem:[#allocation10] sm:$0xff] %vm2028, 0.0
    // Predicated region
    $region70: #{tpu_custom_call.1} parent=1 // pred_check
      _
    $region71: #{tpu_custom_call.1} parent=1 // pred_check_branch
      %2031 = sbr.rel (0) target = $region73
    $region72: #{tpu_custom_call.1} parent=1 // pred_region
      %s2033 = ssub.s32 128, 128
      %2034 = vsyncadd [#allocation4], %s2033
      %s2036 = sshll.u32 [#allocation10], 4
      %s2037 = int_to_ptr.vmem [resolvable:$true] %s2036
      %2039 = dma.vmem_to_hbm [thread:$0]  %s2037, 128, %s13, [#allocation4]
    $region73: #{tpu_custom_call.1} parent=1 // pred_fallthru
      _
    // Predicated region
    $region74: #{tpu_custom_call.1} parent=1 // pred_check
      _
    $region75: #{tpu_custom_call.1} parent=1 // pred_check_branch
      %2041 = sbr.rel (0) target = $region77
    $region76: #{tpu_custom_call.1} parent=1 // pred_region
      %2042 = dma.done [#allocation4], 128
    $region77: #{tpu_custom_call.1} parent=1 // pred_fallthru
      _
    %2043 = vsyncpa [#allocation3], 1
    %2044 = vsyncpa [#allocation6], 1
    %2045 = vsyncpa [#allocation9], 1
    %2046 = vsyncpa [#allocation4], 1

</llo_original>
